<compile_context>
chip_gen: v5e
topology: v5e:2x2
jax: 0.10.0
libtpu: 0.0.40
codegen_flags: <defaults>
</compile_context>

<pallas_src>
import math
import functools

import jax
import jax.numpy as jnp
from jax.experimental import pallas as pl
from jax.experimental.pallas import tpu as pltpu

# ---------------- small synthetic config (stands in for SpeciesLM config) ----------------
VOCAB = 16          # synthetic vocab
TYPE_VOCAB = 2
MAX_POS = 64
HIDDEN = 32         # hidden_size
N_HEADS = 4
HEAD_DIM = HIDDEN // N_HEADS
INTERMEDIATE = 64
N_LAYERS = 2
BASE_CLASSES = 4    # out_channels of the head
KSIZE = 6           # ConvTranspose1d kernel_size
LN_EPS = 1e-12
PAD_C = 128         # lane-padded per-tap channel block for the convT matmul


def _bf16(x):
    return x.astype(jnp.bfloat16)


def _gelu(x):
    # TODO(synk): HF BERT uses erf-GELU; tanh approximation differs at ~1e-3 scale.
    c = math.sqrt(2.0 / math.pi)
    return 0.5 * x * (1.0 + jnp.tanh(c * (x + 0.044715 * x * x * x)))


def _layernorm(y, g, b):
    mu = jnp.mean(y, axis=-1, keepdims=True)
    var = jnp.mean(jnp.square(y - mu), axis=-1, keepdims=True)
    return (y - mu) * jax.lax.rsqrt(var + LN_EPS) * g + b


# ---------------- the single fused model kernel (grid = layers) ----------------
def _model_kernel(emb_ref, mask_ref, eg_ref, eb_ref,
                  wqkv_ref, bqkv_ref, wo_ref, bo_ref,
                  ln1g_ref, ln1b_ref, w1_ref, b1_ref, w2_ref, b2_ref,
                  ln2g_ref, ln2b_ref, hw_ref, hb_ref,
                  o_ref, x_vmem,
                  *, B, S, NH, HD, K, C, PC):
    H = NH * HD
    layer = pl.program_id(0)
    n_layers = pl.num_programs(0)

    # ---- embedding LayerNorm, fused into the first grid step (no extra launch)
    @pl.when(layer == 0)
    def _():
        x_vmem[...] = _layernorm(emb_ref[...], eg_ref[...], eb_ref[...])

    x = x_vmem[...]                                            # (B*S, H) f32, VMEM-resident

    # ---- fused QKV projection over ALL B*S rows: one bf16 matmul, f32 accumulate
    qkv = jnp.dot(_bf16(x), wqkv_ref[0],
                  preferred_element_type=jnp.float32) + bqkv_ref[0]      # (B*S, 3H)

    # ---- attention: batched dot_generals with a leading (batch*head) batch dim
    q_parts, k_parts, v_parts = [], [], []
    for b in range(B):
        r0 = b * S
        for h in range(NH):
            c0 = h * HD
            q_parts.append(qkv[r0:r0 + S, c0:c0 + HD])
            k_parts.append(qkv[r0:r0 + S, H + c0:H + c0 + HD])
            v_parts.append(qkv[r0:r0 + S, 2 * H + c0:2 * H + c0 + HD])
    q_s = _bf16(jnp.stack(q_parts, axis=0))                    # (B*NH, S, HD)
    k_s = _bf16(jnp.stack(k_parts, axis=0))
    v_s = _bf16(jnp.stack(v_parts, axis=0))

    s = jnp.einsum('nqd,nkd->nqk', q_s, k_s,
                   preferred_element_type=jnp.float32) * (1.0 / math.sqrt(HD))
    s = s + mask_ref[...]                                      # additive (B*NH,1,S) mask
    s = s - jnp.max(s, axis=-1, keepdims=True)
    p = jnp.exp(s)
    p = p * pl.reciprocal(jnp.sum(p, axis=-1, keepdims=True), approx=True)

    ctx = jnp.einsum('nqk,nkd->nqd', _bf16(p), v_s,
                     preferred_element_type=jnp.float32)        # (B*NH, S, HD)

    # re-assemble (B*S, H) context, then ONE (B*S,H)@(H,H) output projection
    ctx_rows = []
    for b in range(B):
        ctx_rows.append(jnp.concatenate([ctx[b * NH + h] for h in range(NH)], axis=-1))
    ctx_flat = jnp.concatenate(ctx_rows, axis=0)                # (B*S, H)

    attn = jnp.dot(_bf16(ctx_flat), wo_ref[0],
                   preferred_element_type=jnp.float32) + bo_ref[0]

    # ---- residual + LN1, FFN up + GELU, FFN down, residual + LN2 (all fused)
    y = _layernorm(attn + x, ln1g_ref[0], ln1b_ref[0])
    hmid = jnp.dot(_bf16(y), w1_ref[0],
                   preferred_element_type=jnp.float32) + b1_ref[0]
    hmid = _gelu(hmid)
    ffn = jnp.dot(_bf16(hmid), w2_ref[0],
                  preferred_element_type=jnp.float32) + b2_ref[0]
    z = _layernorm(ffn + y, ln2g_ref[0], ln2b_ref[0])

    x_vmem[...] = z                                             # stays in VMEM across layers

    # ---- last layer: x[:, 2:-1, :] -> ConvTranspose1d head, fully in-kernel
    @pl.when(layer == n_layers - 1)
    def _():
        Sp = S - 3                   # rows kept per sequence after [:, 2:-1, :]
        Lout = Sp + K - 1            # ConvTranspose1d output length (stride=1, pad=0)
        # one wide matmul over all rows: tap k / channel c lives at column k*PC + c
        yk = jnp.dot(_bf16(z), hw_ref[...],
                     preferred_element_type=jnp.float32)         # (B*S, K*PC)
        for b in range(B):
            r0 = b * S + 2                                       # the [:, 2:-1, :] slice
            acc = None
            for k in range(K):
                tap = yk[r0:r0 + Sp, k * PC:(k + 1) * PC]        # (Sp, PC), lane-aligned
                pieces = []
                if k > 0:
                    pieces.append(jnp.zeros((k, PC), jnp.float32))
                pieces.append(tap)
                if K - 1 - k > 0:
                    pieces.append(jnp.zeros((K - 1 - k, PC), jnp.float32))
                shifted = pieces[0] if len(pieces) == 1 else jnp.concatenate(pieces, axis=0)
                acc = shifted if acc is None else acc + shifted  # register accumulation
            o_ref[b] = (acc[:, :C] + hb_ref[...]).astype(o_ref.dtype)   # single store


# ---------------- deterministic parameter init (stacked per-layer weights) ----------------
def init_params(key):
    H, I, L = HIDDEN, INTERMEDIATE, N_LAYERS
    K, C, PC = KSIZE, BASE_CLASSES, PAD_C
    keys = iter(jax.random.split(key, 4 + 6 * L))

    def nrm(shape):
        return (0.02 * jax.random.normal(next(keys), shape)).astype(jnp.float32)

    wqkv, wo, w1, w2 = [], [], [], []
    for _ in range(L):
        wq_, wk_, wv_ = nrm((H, H)), nrm((H, H)), nrm((H, H))
        wqkv.append(jnp.concatenate([wq_, wk_, wv_], axis=1))    # fused Q|K|V columns
        wo.append(nrm((H, H)))
        w1.append(nrm((H, I)))
        w2.append(nrm((I, H)))

    # PyTorch ConvTranspose1d weight layout: (in_channels=H, out_channels=C, kernel=K).
    hw_torch = nrm((H, C, K))
    hw = jnp.transpose(hw_torch, (0, 2, 1))                      # (H, K, C): tap-major
    hw = jnp.zeros((H, K, PC), jnp.float32).at[:, :, :C].set(hw) # lane-pad channels
    hw = hw.reshape(H, K * PC)

    return {
        "word_emb": nrm((VOCAB, H)),
        "pos_emb": nrm((MAX_POS, H)),
        "type_emb": nrm((TYPE_VOCAB, H)),
        "emb_ln_g": jnp.ones((1, H), jnp.float32),
        "emb_ln_b": jnp.zeros((1, H), jnp.float32),
        # per-layer weights stacked on a leading L axis; matmul weights pre-cast to bf16
        "wqkv": jnp.stack(wqkv).astype(jnp.bfloat16),            # (L, H, 3H)
        "bqkv": jnp.zeros((L, 1, 3 * H), jnp.float32),
        "wo": jnp.stack(wo).astype(jnp.bfloat16),                # (L, H, H)
        "bo": jnp.zeros((L, 1, H), jnp.float32),
        "ln1_g": jnp.ones((L, 1, H), jnp.float32),
        "ln1_b": jnp.zeros((L, 1, H), jnp.float32),
        "w1": jnp.stack(w1).astype(jnp.bfloat16),                # (L, H, I)
        "b1": jnp.zeros((L, 1, I), jnp.float32),
        "w2": jnp.stack(w2).astype(jnp.bfloat16),                # (L, I, H)
        "b2": jnp.zeros((L, 1, H), jnp.float32),
        "ln2_g": jnp.ones((L, 1, H), jnp.float32),
        "ln2_b": jnp.zeros((L, 1, H), jnp.float32),
        "head_w": hw.astype(jnp.bfloat16),                       # (H, K*PC)
        "head_b": jnp.zeros((1, C), jnp.float32),
    }


# ---------------- forward (mirrors FineTunedSpeciesLM.forward) ----------------
def specieslm_forward(params, input_ids, attention_mask=None, token_type_ids=None):
    B, S = input_ids.shape
    H, NH, HD, I = HIDDEN, N_HEADS, HEAD_DIM, INTERMEDIATE
    K, C, PC = KSIZE, BASE_CLASSES, PAD_C
    L = params["wqkv"].shape[0]
    M = B * S
    Sp = S - 3
    Lout = Sp + K - 1

    if token_type_ids is None:
        token_type_ids = jnp.zeros((B, S), jnp.int32)
    pos_ids = jnp.arange(S, dtype=jnp.int32)

    # embeddings (table gathers stay in XLA), flattened to (B*S, H)
    emb = (params["word_emb"][input_ids]
           + params["pos_emb"][pos_ids][None, :, :]
           + params["type_emb"][token_type_ids]).astype(jnp.float32).reshape(M, H)

    # HF-style additive attention mask (0 keep / -10000 pad), one row per (batch, head)
    if attention_mask is None:
        add_mask = jnp.zeros((B, 1, S), jnp.float32)
    else:
        add_mask = (1.0 - attention_mask.astype(jnp.float32)).reshape(B, 1, S) * -10000.0
    add_mask = jnp.repeat(add_mask, NH, axis=0)                  # (B*NH, 1, S)

    kern = functools.partial(_model_kernel, B=B, S=S, NH=NH, HD=HD, K=K, C=C, PC=PC)

    def const(shape):                     # layer-invariant input (copied into VMEM once)
        return pl.BlockSpec(shape, lambda l: (0,) * len(shape))

    def per_layer(shape):                 # stacked per-layer weight, indexed by grid step
        return pl.BlockSpec((1,) + shape, lambda l: (l,) + (0,) * len(shape))

    return pl.pallas_call(
        kern,
        grid=(L,),
        in_specs=[
            const((M, H)),                    # embeddings
            const((B * NH, 1, S)),            # additive mask
            const((1, H)), const((1, H)),     # embedding LN gamma / beta
            per_layer((H, 3 * H)), per_layer((1, 3 * H)),   # wqkv, bqkv
            per_layer((H, H)), per_layer((1, H)),           # wo, bo
            per_layer((1, H)), per_layer((1, H)),           # ln1 g / b
            per_layer((H, I)), per_layer((1, I)),           # w1, b1
            per_layer((I, H)), per_layer((1, H)),           # w2, b2
            per_layer((1, H)), per_layer((1, H)),           # ln2 g / b
            const((H, K * PC)),               # convT weight (tap-major, lane-padded)
            const((1, C)),                    # convT bias
        ],
        out_specs=pl.BlockSpec((B, Lout, C), lambda l: (0, 0, 0)),
        out_shape=jax.ShapeDtypeStruct((B, Lout, C), jnp.float32),
        scratch_shapes=[pltpu.VMEM((M, H), jnp.float32)],   # VMEM-resident activation
        compiler_params=pltpu.CompilerParams(
            dimension_semantics=("arbitrary",),             # layers are sequential
            vmem_limit_bytes=32 * 1024 * 1024),
    )(emb, add_mask,
      params["emb_ln_g"], params["emb_ln_b"],
      params["wqkv"], params["bqkv"], params["wo"], params["bo"],
      params["ln1_g"], params["ln1_b"], params["w1"], params["b1"],
      params["w2"], params["b2"], params["ln2_g"], params["ln2_b"],
      params["head_w"], params["head_b"])


if __name__ == "__main__":
    key = jax.random.PRNGKey(0)
    pkey, ikey = jax.random.split(key)
    params = init_params(pkey)

    B, S = 2, 8
    input_ids = jax.random.randint(ikey, (B, S), 0, VOCAB, dtype=jnp.int32)

    out = specieslm_forward(params, input_ids)
    jax.block_until_ready(out)

    assert out.shape == (B, (S - 3) + KSIZE - 1, BASE_CLASSES), out.shape
    assert out.dtype == jnp.float32
    assert bool(jnp.all(jnp.isfinite(out)))
    print("KERNEL_OK")
</pallas_src>

<mosaic_0001>
module attributes {stable_mosaic.version = 11 : i64} {
  func.func @_model_kernel(%arg0: i32, %arg1: memref<16x32xf32, #tpu.memory_space<vmem>>, %arg2: memref<8x1x8xf32, #tpu.memory_space<vmem>>, %arg3: memref<1x32xf32, #tpu.memory_space<vmem>>, %arg4: memref<1x32xf32, #tpu.memory_space<vmem>>, %arg5: memref<1x32x96xbf16, #tpu.memory_space<vmem>>, %arg6: memref<1x1x96xf32, #tpu.memory_space<vmem>>, %arg7: memref<1x32x32xbf16, #tpu.memory_space<vmem>>, %arg8: memref<1x1x32xf32, #tpu.memory_space<vmem>>, %arg9: memref<1x1x32xf32, #tpu.memory_space<vmem>>, %arg10: memref<1x1x32xf32, #tpu.memory_space<vmem>>, %arg11: memref<1x32x64xbf16, #tpu.memory_space<vmem>>, %arg12: memref<1x1x64xf32, #tpu.memory_space<vmem>>, %arg13: memref<1x64x32xbf16, #tpu.memory_space<vmem>>, %arg14: memref<1x1x32xf32, #tpu.memory_space<vmem>>, %arg15: memref<1x1x32xf32, #tpu.memory_space<vmem>>, %arg16: memref<1x1x32xf32, #tpu.memory_space<vmem>>, %arg17: memref<32x768xbf16, #tpu.memory_space<vmem>>, %arg18: memref<1x4xf32, #tpu.memory_space<vmem>>, %arg19: memref<2x10x4xf32, #tpu.memory_space<vmem>>, %arg20: memref<16x32xf32, #tpu.memory_space<vmem>>) attributes {dimension_semantics = [#tpu.dimension_semantics<arbitrary>], iteration_bounds = array<i64: 2>, scalar_prefetch = 0 : i64, scratch_operands = 1 : i64, tpu.core_type = #tpu.core_type<tc>, window_params = [{pipeline_mode = #tpu.pipeline_mode<synchronous>, transform_indices = @transform_0, window_bounds = array<i64: 16, 32>}, {pipeline_mode = #tpu.pipeline_mode<synchronous>, transform_indices = @transform_1, window_bounds = array<i64: 8, 1, 8>}, {pipeline_mode = #tpu.pipeline_mode<synchronous>, transform_indices = @transform_2, window_bounds = array<i64: 1, 32>}, {pipeline_mode = #tpu.pipeline_mode<synchronous>, transform_indices = @transform_3, window_bounds = array<i64: 1, 32>}, {transform_indices = @transform_4, window_bounds = array<i64: 1, 32, 96>}, {transform_indices = @transform_5, window_bounds = array<i64: 1, 1, 96>}, {transform_indices = @transform_6, window_bounds = array<i64: 1, 32, 32>}, {transform_indices = @transform_7, window_bounds = array<i64: 1, 1, 32>}, {transform_indices = @transform_8, window_bounds = array<i64: 1, 1, 32>}, {transform_indices = @transform_9, window_bounds = array<i64: 1, 1, 32>}, {transform_indices = @transform_10, window_bounds = array<i64: 1, 32, 64>}, {transform_indices = @transform_11, window_bounds = array<i64: 1, 1, 64>}, {transform_indices = @transform_12, window_bounds = array<i64: 1, 64, 32>}, {transform_indices = @transform_13, window_bounds = array<i64: 1, 1, 32>}, {transform_indices = @transform_14, window_bounds = array<i64: 1, 1, 32>}, {transform_indices = @transform_15, window_bounds = array<i64: 1, 1, 32>}, {pipeline_mode = #tpu.pipeline_mode<synchronous>, transform_indices = @transform_16, window_bounds = array<i64: 32, 768>}, {pipeline_mode = #tpu.pipeline_mode<synchronous>, transform_indices = @transform_17, window_bounds = array<i64: 1, 4>}, {pipeline_mode = #tpu.pipeline_mode<synchronous>, transform_indices = @transform_18, window_bounds = array<i64: 2, 10, 4>}]} {
    %c0_i32 = arith.constant 0 : i32
    %0 = arith.cmpi eq, %arg0, %c0_i32 : i32
    %1 = arith.extui %0 : i1 to i32
    %c0_i32_0 = arith.constant 0 : i32
    %2 = arith.cmpi ne, %1, %c0_i32_0 : i32
    scf.if %2 {
      %c0_66 = arith.constant 0 : index
      %c0_67 = arith.constant 0 : index
      %198 = vector.load %arg1[%c0_66, %c0_67] : memref<16x32xf32, #tpu.memory_space<vmem>>, vector<16x32xf32>
      %c0_68 = arith.constant 0 : index
      %c0_69 = arith.constant 0 : index
      %199 = vector.load %arg3[%c0_68, %c0_69] : memref<1x32xf32, #tpu.memory_space<vmem>>, vector<1x32xf32>
      %c0_70 = arith.constant 0 : index
      %c0_71 = arith.constant 0 : index
      %200 = vector.load %arg4[%c0_70, %c0_71] : memref<1x32xf32, #tpu.memory_space<vmem>>, vector<1x32xf32>
      %cst_72 = arith.constant dense<0.000000e+00> : vector<16xf32>
      %201 = vector.multi_reduction <add>, %198, %cst_72 [1] : vector<16x32xf32> to vector<16xf32>
      %202 = vector.shape_cast %201 : vector<16xf32> to vector<16x1xf32>
      %cst_73 = arith.constant 3.200000e+01 : f32
      %203 = vector.broadcast %cst_73 : f32 to vector<16x1xf32>
      %204 = arith.divf %202, %203 : vector<16x1xf32>
      %205 = vector.broadcast %204 : vector<16x1xf32> to vector<16x32xf32>
      %206 = arith.subf %198, %205 : vector<16x32xf32>
      %207 = arith.mulf %206, %206 : vector<16x32xf32>
      %cst_74 = arith.constant dense<0.000000e+00> : vector<16xf32>
      %208 = vector.multi_reduction <add>, %207, %cst_74 [1] : vector<16x32xf32> to vector<16xf32>
      %209 = vector.shape_cast %208 : vector<16xf32> to vector<16x1xf32>
      %cst_75 = arith.constant 3.200000e+01 : f32
      %210 = vector.broadcast %cst_75 : f32 to vector<16x1xf32>
      %211 = arith.divf %209, %210 : vector<16x1xf32>
      %212 = vector.broadcast %204 : vector<16x1xf32> to vector<16x32xf32>
      %213 = arith.subf %198, %212 : vector<16x32xf32>
      %cst_76 = arith.constant 9.99999996E-13 : f32
      %214 = vector.broadcast %cst_76 : f32 to vector<16x1xf32>
      %215 = arith.addf %211, %214 : vector<16x1xf32>
      %216 = math.rsqrt %215 : vector<16x1xf32>
      %217 = vector.broadcast %216 : vector<16x1xf32> to vector<16x32xf32>
      %218 = arith.mulf %213, %217 : vector<16x32xf32>
      %219 = vector.broadcast %199 : vector<1x32xf32> to vector<16x32xf32>
      %220 = arith.mulf %218, %219 : vector<16x32xf32>
      %221 = vector.broadcast %200 : vector<1x32xf32> to vector<16x32xf32>
      %222 = arith.addf %220, %221 : vector<16x32xf32>
      %c0_77 = arith.constant 0 : index
      %c0_78 = arith.constant 0 : index
      %223 = vector.load %arg20[%c0_77, %c0_78] : memref<16x32xf32, #tpu.memory_space<vmem>>, vector<16x32xf32>
      tpu.vector_store %arg20[%c0_77, %c0_78], %222 {strides = array<i32>} : memref<16x32xf32, #tpu.memory_space<vmem>>, vector<16x32xf32>,
    } else {
    }
    %c0 = arith.constant 0 : index
    %c0_1 = arith.constant 0 : index
    %3 = vector.load %arg20[%c0, %c0_1] : memref<16x32xf32, #tpu.memory_space<vmem>>, vector<16x32xf32>
    %4 = arith.truncf %3 : vector<16x32xf32> to vector<16x32xbf16>
    %c0_2 = arith.constant 0 : index
    %c0_3 = arith.constant 0 : index
    %c0_4 = arith.constant 0 : index
    %5 = vector.load %arg5[%c0_2, %c0_3, %c0_4] : memref<1x32x96xbf16, #tpu.memory_space<vmem>>, vector<1x32x96xbf16>
    %6 = vector.shape_cast %5 : vector<1x32x96xbf16> to vector<32x96xbf16>
    %cst = arith.constant dense<0.000000e+00> : vector<16x96xf32>
    %7 = tpu.matmul %4, %6, %cst {dimension_numbers = #tpu.dot_dimension_numbers<[1], [0], [0], [1], [0, 0, 1, 1], [], []>} : vector<16x32xbf16>, vector<32x96xbf16>, vector<16x96xf32> -> vector<16x96xf32>
    %c0_5 = arith.constant 0 : index
    %c0_6 = arith.constant 0 : index
    %c0_7 = arith.constant 0 : index
    %8 = vector.load %arg6[%c0_5, %c0_6, %c0_7] : memref<1x1x96xf32, #tpu.memory_space<vmem>>, vector<1x1x96xf32>
    %9 = vector.shape_cast %8 : vector<1x1x96xf32> to vector<1x96xf32>
    %10 = vector.broadcast %9 : vector<1x96xf32> to vector<16x96xf32>
    %11 = arith.addf %7, %10 : vector<16x96xf32>
    %12 = vector.extract_strided_slice %11 {offsets = [0, 0], sizes = [8, 8], strides = [1, 1]} : vector<16x96xf32> to vector<8x8xf32>
    %13 = vector.extract_strided_slice %11 {offsets = [0, 32], sizes = [8, 8], strides = [1, 1]} : vector<16x96xf32> to vector<8x8xf32>
    %14 = vector.extract_strided_slice %11 {offsets = [0, 64], sizes = [8, 8], strides = [1, 1]} : vector<16x96xf32> to vector<8x8xf32>
    %15 = vector.extract_strided_slice %11 {offsets = [0, 8], sizes = [8, 8], strides = [1, 1]} : vector<16x96xf32> to vector<8x8xf32>
    %16 = vector.extract_strided_slice %11 {offsets = [0, 40], sizes = [8, 8], strides = [1, 1]} : vector<16x96xf32> to vector<8x8xf32>
    %17 = vector.extract_strided_slice %11 {offsets = [0, 72], sizes = [8, 8], strides = [1, 1]} : vector<16x96xf32> to vector<8x8xf32>
    %18 = vector.extract_strided_slice %11 {offsets = [0, 16], sizes = [8, 8], strides = [1, 1]} : vector<16x96xf32> to vector<8x8xf32>
    %19 = vector.extract_strided_slice %11 {offsets = [0, 48], sizes = [8, 8], strides = [1, 1]} : vector<16x96xf32> to vector<8x8xf32>
    %20 = vector.extract_strided_slice %11 {offsets = [0, 80], sizes = [8, 8], strides = [1, 1]} : vector<16x96xf32> to vector<8x8xf32>
    %21 = vector.extract_strided_slice %11 {offsets = [0, 24], sizes = [8, 8], strides = [1, 1]} : vector<16x96xf32> to vector<8x8xf32>
    %22 = vector.extract_strided_slice %11 {offsets = [0, 56], sizes = [8, 8], strides = [1, 1]} : vector<16x96xf32> to vector<8x8xf32>
    %23 = vector.extract_strided_slice %11 {offsets = [0, 88], sizes = [8, 8], strides = [1, 1]} : vector<16x96xf32> to vector<8x8xf32>
    %24 = vector.extract_strided_slice %11 {offsets = [8, 0], sizes = [8, 8], strides = [1, 1]} : vector<16x96xf32> to vector<8x8xf32>
    %25 = vector.extract_strided_slice %11 {offsets = [8, 32], sizes = [8, 8], strides = [1, 1]} : vector<16x96xf32> to vector<8x8xf32>
    %26 = vector.extract_strided_slice %11 {offsets = [8, 64], sizes = [8, 8], strides = [1, 1]} : vector<16x96xf32> to vector<8x8xf32>
    %27 = vector.extract_strided_slice %11 {offsets = [8, 8], sizes = [8, 8], strides = [1, 1]} : vector<16x96xf32> to vector<8x8xf32>
    %28 = vector.extract_strided_slice %11 {offsets = [8, 40], sizes = [8, 8], strides = [1, 1]} : vector<16x96xf32> to vector<8x8xf32>
    %29 = vector.extract_strided_slice %11 {offsets = [8, 72], sizes = [8, 8], strides = [1, 1]} : vector<16x96xf32> to vector<8x8xf32>
    %30 = vector.extract_strided_slice %11 {offsets = [8, 16], sizes = [8, 8], strides = [1, 1]} : vector<16x96xf32> to vector<8x8xf32>
    %31 = vector.extract_strided_slice %11 {offsets = [8, 48], sizes = [8, 8], strides = [1, 1]} : vector<16x96xf32> to vector<8x8xf32>
    %32 = vector.extract_strided_slice %11 {offsets = [8, 80], sizes = [8, 8], strides = [1, 1]} : vector<16x96xf32> to vector<8x8xf32>
    %33 = vector.extract_strided_slice %11 {offsets = [8, 24], sizes = [8, 8], strides = [1, 1]} : vector<16x96xf32> to vector<8x8xf32>
    %34 = vector.extract_strided_slice %11 {offsets = [8, 56], sizes = [8, 8], strides = [1, 1]} : vector<16x96xf32> to vector<8x8xf32>
    %35 = vector.extract_strided_slice %11 {offsets = [8, 88], sizes = [8, 8], strides = [1, 1]} : vector<16x96xf32> to vector<8x8xf32>
    %36 = vector.shape_cast %12 : vector<8x8xf32> to vector<1x8x8xf32>
    %37 = vector.shape_cast %15 : vector<8x8xf32> to vector<1x8x8xf32>
    %38 = vector.shape_cast %18 : vector<8x8xf32> to vector<1x8x8xf32>
    %39 = vector.shape_cast %21 : vector<8x8xf32> to vector<1x8x8xf32>
    %40 = vector.shape_cast %24 : vector<8x8xf32> to vector<1x8x8xf32>
    %41 = vector.shape_cast %27 : vector<8x8xf32> to vector<1x8x8xf32>
    %42 = vector.shape_cast %30 : vector<8x8xf32> to vector<1x8x8xf32>
    %43 = vector.shape_cast %33 : vector<8x8xf32> to vector<1x8x8xf32>
    %44 = tpu.concatenate %36, %37, %38, %39, %40, %41, %42, %43 in 0 : vector<1x8x8xf32>, vector<1x8x8xf32>, vector<1x8x8xf32>, vector<1x8x8xf32>, vector<1x8x8xf32>, vector<1x8x8xf32>, vector<1x8x8xf32>, vector<1x8x8xf32> -> vector<8x8x8xf32>
    %45 = arith.truncf %44 : vector<8x8x8xf32> to vector<8x8x8xbf16>
    %46 = vector.shape_cast %13 : vector<8x8xf32> to vector<1x8x8xf32>
    %47 = vector.shape_cast %16 : vector<8x8xf32> to vector<1x8x8xf32>
    %48 = vector.shape_cast %19 : vector<8x8xf32> to vector<1x8x8xf32>
    %49 = vector.shape_cast %22 : vector<8x8xf32> to vector<1x8x8xf32>
    %50 = vector.shape_cast %25 : vector<8x8xf32> to vector<1x8x8xf32>
    %51 = vector.shape_cast %28 : vector<8x8xf32> to vector<1x8x8xf32>
    %52 = vector.shape_cast %31 : vector<8x8xf32> to vector<1x8x8xf32>
    %53 = vector.shape_cast %34 : vector<8x8xf32> to vector<1x8x8xf32>
    %54 = tpu.concatenate %46, %47, %48, %49, %50, %51, %52, %53 in 0 : vector<1x8x8xf32>, vector<1x8x8xf32>, vector<1x8x8xf32>, vector<1x8x8xf32>, vector<1x8x8xf32>, vector<1x8x8xf32>, vector<1x8x8xf32>, vector<1x8x8xf32> -> vector<8x8x8xf32>
    %55 = arith.truncf %54 : vector<8x8x8xf32> to vector<8x8x8xbf16>
    %56 = vector.shape_cast %14 : vector<8x8xf32> to vector<1x8x8xf32>
    %57 = vector.shape_cast %17 : vector<8x8xf32> to vector<1x8x8xf32>
    %58 = vector.shape_cast %20 : vector<8x8xf32> to vector<1x8x8xf32>
    %59 = vector.shape_cast %23 : vector<8x8xf32> to vector<1x8x8xf32>
    %60 = vector.shape_cast %26 : vector<8x8xf32> to vector<1x8x8xf32>
    %61 = vector.shape_cast %29 : vector<8x8xf32> to vector<1x8x8xf32>
    %62 = vector.shape_cast %32 : vector<8x8xf32> to vector<1x8x8xf32>
    %63 = vector.shape_cast %35 : vector<8x8xf32> to vector<1x8x8xf32>
    %64 = tpu.concatenate %56, %57, %58, %59, %60, %61, %62, %63 in 0 : vector<1x8x8xf32>, vector<1x8x8xf32>, vector<1x8x8xf32>, vector<1x8x8xf32>, vector<1x8x8xf32>, vector<1x8x8xf32>, vector<1x8x8xf32>, vector<1x8x8xf32> -> vector<8x8x8xf32>
    %65 = arith.truncf %64 : vector<8x8x8xf32> to vector<8x8x8xbf16>
    "tpu.trace_start"() <{level = 10 : i32, message = "nqd,nkd->nqk"}> : () -> ()
    %cst_8 = arith.constant dense<0.000000e+00> : vector<8x8x8xf32>
    %66 = tpu.matmul %45, %55, %cst_8 {dimension_numbers = #tpu.dot_dimension_numbers<[2], [2], [1], [1], [0, 0, 0, 1, 1, 1], [0], [0]>} : vector<8x8x8xbf16>, vector<8x8x8xbf16>, vector<8x8x8xf32> -> vector<8x8x8xf32>
    "tpu.trace_stop"() : () -> ()
    %cst_9 = arith.constant 0.353553385 : f32
    %67 = vector.broadcast %cst_9 : f32 to vector<8x8x8xf32>
    %68 = arith.mulf %66, %67 : vector<8x8x8xf32>
    %c0_10 = arith.constant 0 : index
    %c0_11 = arith.constant 0 : index
    %c0_12 = arith.constant 0 : index
    %69 = vector.load %arg2[%c0_10, %c0_11, %c0_12] : memref<8x1x8xf32, #tpu.memory_space<vmem>>, vector<8x1x8xf32>
    %70 = vector.broadcast %69 : vector<8x1x8xf32> to vector<8x8x8xf32>
    %71 = arith.addf %68, %70 : vector<8x8x8xf32>
    %cst_13 = arith.constant dense<0xFF800000> : vector<8x8xf32>
    %72 = vector.multi_reduction <maximumf>, %71, %cst_13 [2] : vector<8x8x8xf32> to vector<8x8xf32>
    %73 = vector.shape_cast %72 : vector<8x8xf32> to vector<8x8x1xf32>
    %74 = vector.broadcast %73 : vector<8x8x1xf32> to vector<8x8x8xf32>
    %75 = arith.subf %71, %74 : vector<8x8x8xf32>
    %76 = math.exp %75 : vector<8x8x8xf32>
    %cst_14 = arith.constant dense<0.000000e+00> : vector<8x8xf32>
    %77 = vector.multi_reduction <add>, %76, %cst_14 [2] : vector<8x8x8xf32> to vector<8x8xf32>
    %78 = vector.shape_cast %77 : vector<8x8xf32> to vector<8x8x1xf32>
    %79 = tpu.reciprocal %78 {approx = true} : vector<8x8x1xf32> -> vector<8x8x1xf32>
    %80 = vector.broadcast %79 : vector<8x8x1xf32> to vector<8x8x8xf32>
    %81 = arith.mulf %76, %80 : vector<8x8x8xf32>
    %82 = arith.truncf %81 : vector<8x8x8xf32> to vector<8x8x8xbf16>
    "tpu.trace_start"() <{level = 10 : i32, message = "nqk,nkd->nqd"}> : () -> ()
    %cst_15 = arith.constant dense<0.000000e+00> : vector<8x8x8xf32>
    %83 = tpu.matmul %82, %65, %cst_15 {dimension_numbers = #tpu.dot_dimension_numbers<[2], [1], [1], [2], [0, 0, 0, 1, 1, 2], [0], [0]>} : vector<8x8x8xbf16>, vector<8x8x8xbf16>, vector<8x8x8xf32> -> vector<8x8x8xf32>
    "tpu.trace_stop"() : () -> ()
    %84 = vector.extract_strided_slice %83 {offsets = [0, 0, 0], sizes = [1, 8, 8], strides = [1, 1, 1]} : vector<8x8x8xf32> to vector<1x8x8xf32>
    %85 = vector.shape_cast %84 : vector<1x8x8xf32> to vector<8x8xf32>
    %86 = vector.extract_strided_slice %83 {offsets = [1, 0, 0], sizes = [1, 8, 8], strides = [1, 1, 1]} : vector<8x8x8xf32> to vector<1x8x8xf32>
    %87 = vector.shape_cast %86 : vector<1x8x8xf32> to vector<8x8xf32>
    %88 = vector.extract_strided_slice %83 {offsets = [2, 0, 0], sizes = [1, 8, 8], strides = [1, 1, 1]} : vector<8x8x8xf32> to vector<1x8x8xf32>
    %89 = vector.shape_cast %88 : vector<1x8x8xf32> to vector<8x8xf32>
    %90 = vector.extract_strided_slice %83 {offsets = [3, 0, 0], sizes = [1, 8, 8], strides = [1, 1, 1]} : vector<8x8x8xf32> to vector<1x8x8xf32>
    %91 = vector.shape_cast %90 : vector<1x8x8xf32> to vector<8x8xf32>
    %92 = tpu.concatenate %85, %87, %89, %91 in 1 : vector<8x8xf32>, vector<8x8xf32>, vector<8x8xf32>, vector<8x8xf32> -> vector<8x32xf32>
    %93 = vector.extract_strided_slice %83 {offsets = [4, 0, 0], sizes = [1, 8, 8], strides = [1, 1, 1]} : vector<8x8x8xf32> to vector<1x8x8xf32>
    %94 = vector.shape_cast %93 : vector<1x8x8xf32> to vector<8x8xf32>
    %95 = vector.extract_strided_slice %83 {offsets = [5, 0, 0], sizes = [1, 8, 8], strides = [1, 1, 1]} : vector<8x8x8xf32> to vector<1x8x8xf32>
    %96 = vector.shape_cast %95 : vector<1x8x8xf32> to vector<8x8xf32>
    %97 = vector.extract_strided_slice %83 {offsets = [6, 0, 0], sizes = [1, 8, 8], strides = [1, 1, 1]} : vector<8x8x8xf32> to vector<1x8x8xf32>
    %98 = vector.shape_cast %97 : vector<1x8x8xf32> to vector<8x8xf32>
    %99 = vector.extract_strided_slice %83 {offsets = [7, 0, 0], sizes = [1, 8, 8], strides = [1, 1, 1]} : vector<8x8x8xf32> to vector<1x8x8xf32>
    %100 = vector.shape_cast %99 : vector<1x8x8xf32> to vector<8x8xf32>
    %101 = tpu.concatenate %94, %96, %98, %100 in 1 : vector<8x8xf32>, vector<8x8xf32>, vector<8x8xf32>, vector<8x8xf32> -> vector<8x32xf32>
    %102 = tpu.concatenate %92, %101 in 0 : vector<8x32xf32>, vector<8x32xf32> -> vector<16x32xf32>
    %103 = arith.truncf %102 : vector<16x32xf32> to vector<16x32xbf16>
    %c0_16 = arith.constant 0 : index
    %c0_17 = arith.constant 0 : index
    %c0_18 = arith.constant 0 : index
    %104 = vector.load %arg7[%c0_16, %c0_17, %c0_18] : memref<1x32x32xbf16, #tpu.memory_space<vmem>>, vector<1x32x32xbf16>
    %105 = vector.shape_cast %104 : vector<1x32x32xbf16> to vector<32x32xbf16>
    %cst_19 = arith.constant dense<0.000000e+00> : vector<16x32xf32>
    %106 = tpu.matmul %103, %105, %cst_19 {dimension_numbers = #tpu.dot_dimension_numbers<[1], [0], [0], [1], [0, 0, 1, 1], [], []>} : vector<16x32xbf16>, vector<32x32xbf16>, vector<16x32xf32> -> vector<16x32xf32>
    %c0_20 = arith.constant 0 : index
    %c0_21 = arith.constant 0 : index
    %c0_22 = arith.constant 0 : index
    %107 = vector.load %arg8[%c0_20, %c0_21, %c0_22] : memref<1x1x32xf32, #tpu.memory_space<vmem>>, vector<1x1x32xf32>
    %108 = vector.shape_cast %107 : vector<1x1x32xf32> to vector<1x32xf32>
    %109 = vector.broadcast %108 : vector<1x32xf32> to vector<16x32xf32>
    %110 = arith.addf %106, %109 : vector<16x32xf32>
    %111 = arith.addf %110, %3 : vector<16x32xf32>
    %c0_23 = arith.constant 0 : index
    %c0_24 = arith.constant 0 : index
    %c0_25 = arith.constant 0 : index
    %112 = vector.load %arg9[%c0_23, %c0_24, %c0_25] : memref<1x1x32xf32, #tpu.memory_space<vmem>>, vector<1x1x32xf32>
    %113 = vector.shape_cast %112 : vector<1x1x32xf32> to vector<1x32xf32>
    %c0_26 = arith.constant 0 : index
    %c0_27 = arith.constant 0 : index
    %c0_28 = arith.constant 0 : index
    %114 = vector.load %arg10[%c0_26, %c0_27, %c0_28] : memref<1x1x32xf32, #tpu.memory_space<vmem>>, vector<1x1x32xf32>
    %115 = vector.shape_cast %114 : vector<1x1x32xf32> to vector<1x32xf32>
    %cst_29 = arith.constant dense<0.000000e+00> : vector<16xf32>
    %116 = vector.multi_reduction <add>, %111, %cst_29 [1] : vector<16x32xf32> to vector<16xf32>
    %117 = vector.shape_cast %116 : vector<16xf32> to vector<16x1xf32>
    %cst_30 = arith.constant 3.200000e+01 : f32
    %118 = vector.broadcast %cst_30 : f32 to vector<16x1xf32>
    %119 = arith.divf %117, %118 : vector<16x1xf32>
    %120 = vector.broadcast %119 : vector<16x1xf32> to vector<16x32xf32>
    %121 = arith.subf %111, %120 : vector<16x32xf32>
    %122 = arith.mulf %121, %121 : vector<16x32xf32>
    %cst_31 = arith.constant dense<0.000000e+00> : vector<16xf32>
    %123 = vector.multi_reduction <add>, %122, %cst_31 [1] : vector<16x32xf32> to vector<16xf32>
    %124 = vector.shape_cast %123 : vector<16xf32> to vector<16x1xf32>
    %cst_32 = arith.constant 3.200000e+01 : f32
    %125 = vector.broadcast %cst_32 : f32 to vector<16x1xf32>
    %126 = arith.divf %124, %125 : vector<16x1xf32>
    %127 = vector.broadcast %119 : vector<16x1xf32> to vector<16x32xf32>
    %128 = arith.subf %111, %127 : vector<16x32xf32>
    %cst_33 = arith.constant 9.99999996E-13 : f32
    %129 = vector.broadcast %cst_33 : f32 to vector<16x1xf32>
    %130 = arith.addf %126, %129 : vector<16x1xf32>
    %131 = math.rsqrt %130 : vector<16x1xf32>
    %132 = vector.broadcast %131 : vector<16x1xf32> to vector<16x32xf32>
    %133 = arith.mulf %128, %132 : vector<16x32xf32>
    %134 = vector.broadcast %113 : vector<1x32xf32> to vector<16x32xf32>
    %135 = arith.mulf %133, %134 : vector<16x32xf32>
    %136 = vector.broadcast %115 : vector<1x32xf32> to vector<16x32xf32>
    %137 = arith.addf %135, %136 : vector<16x32xf32>
    %138 = arith.truncf %137 : vector<16x32xf32> to vector<16x32xbf16>
    %c0_34 = arith.constant 0 : index
    %c0_35 = arith.constant 0 : index
    %c0_36 = arith.constant 0 : index
    %139 = vector.load %arg11[%c0_34, %c0_35, %c0_36] : memref<1x32x64xbf16, #tpu.memory_space<vmem>>, vector<1x32x64xbf16>
    %140 = vector.shape_cast %139 : vector<1x32x64xbf16> to vector<32x64xbf16>
    %cst_37 = arith.constant dense<0.000000e+00> : vector<16x64xf32>
    %141 = tpu.matmul %138, %140, %cst_37 {dimension_numbers = #tpu.dot_dimension_numbers<[1], [0], [0], [1], [0, 0, 1, 1], [], []>} : vector<16x32xbf16>, vector<32x64xbf16>, vector<16x64xf32> -> vector<16x64xf32>
    %c0_38 = arith.constant 0 : index
    %c0_39 = arith.constant 0 : index
    %c0_40 = arith.constant 0 : index
    %142 = vector.load %arg12[%c0_38, %c0_39, %c0_40] : memref<1x1x64xf32, #tpu.memory_space<vmem>>, vector<1x1x64xf32>
    %143 = vector.shape_cast %142 : vector<1x1x64xf32> to vector<1x64xf32>
    %144 = vector.broadcast %143 : vector<1x64xf32> to vector<16x64xf32>
    %145 = arith.addf %141, %144 : vector<16x64xf32>
    %cst_41 = arith.constant 5.000000e-01 : f32
    %146 = vector.broadcast %cst_41 : f32 to vector<16x64xf32>
    %147 = arith.mulf %146, %145 : vector<16x64xf32>
    %cst_42 = arith.constant 4.471500e-02 : f32
    %148 = vector.broadcast %cst_42 : f32 to vector<16x64xf32>
    %149 = arith.mulf %148, %145 : vector<16x64xf32>
    %150 = arith.mulf %149, %145 : vector<16x64xf32>
    %151 = arith.mulf %150, %145 : vector<16x64xf32>
    %152 = arith.addf %145, %151 : vector<16x64xf32>
    %cst_43 = arith.constant 0.797884583 : f32
    %153 = vector.broadcast %cst_43 : f32 to vector<16x64xf32>
    %154 = arith.mulf %153, %152 : vector<16x64xf32>
    %155 = math.tanh %154 : vector<16x64xf32>
    %cst_44 = arith.constant 1.000000e+00 : f32
    %156 = vector.broadcast %cst_44 : f32 to vector<16x64xf32>
    %157 = arith.addf %156, %155 : vector<16x64xf32>
    %158 = arith.mulf %147, %157 : vector<16x64xf32>
    %159 = arith.truncf %158 : vector<16x64xf32> to vector<16x64xbf16>
    %c0_45 = arith.constant 0 : index
    %c0_46 = arith.constant 0 : index
    %c0_47 = arith.constant 0 : index
    %160 = vector.load %arg13[%c0_45, %c0_46, %c0_47] : memref<1x64x32xbf16, #tpu.memory_space<vmem>>, vector<1x64x32xbf16>
    %161 = vector.shape_cast %160 : vector<1x64x32xbf16> to vector<64x32xbf16>
    %cst_48 = arith.constant dense<0.000000e+00> : vector<16x32xf32>
    %162 = tpu.matmul %159, %161, %cst_48 {dimension_numbers = #tpu.dot_dimension_numbers<[1], [0], [0], [1], [0, 0, 1, 1], [], []>} : vector<16x64xbf16>, vector<64x32xbf16>, vector<16x32xf32> -> vector<16x32xf32>
    %c0_49 = arith.constant 0 : index
    %c0_50 = arith.constant 0 : index
    %c0_51 = arith.constant 0 : index
    %163 = vector.load %arg14[%c0_49, %c0_50, %c0_51] : memref<1x1x32xf32, #tpu.memory_space<vmem>>, vector<1x1x32xf32>
    %164 = vector.shape_cast %163 : vector<1x1x32xf32> to vector<1x32xf32>
    %165 = vector.broadcast %164 : vector<1x32xf32> to vector<16x32xf32>
    %166 = arith.addf %162, %165 : vector<16x32xf32>
    %167 = arith.addf %166, %137 : vector<16x32xf32>
    %c0_52 = arith.constant 0 : index
    %c0_53 = arith.constant 0 : index
    %c0_54 = arith.constant 0 : index
    %168 = vector.load %arg15[%c0_52, %c0_53, %c0_54] : memref<1x1x32xf32, #tpu.memory_space<vmem>>, vector<1x1x32xf32>
    %169 = vector.shape_cast %168 : vector<1x1x32xf32> to vector<1x32xf32>
    %c0_55 = arith.constant 0 : index
    %c0_56 = arith.constant 0 : index
    %c0_57 = arith.constant 0 : index
    %170 = vector.load %arg16[%c0_55, %c0_56, %c0_57] : memref<1x1x32xf32, #tpu.memory_space<vmem>>, vector<1x1x32xf32>
    %171 = vector.shape_cast %170 : vector<1x1x32xf32> to vector<1x32xf32>
    %cst_58 = arith.constant dense<0.000000e+00> : vector<16xf32>
    %172 = vector.multi_reduction <add>, %167, %cst_58 [1] : vector<16x32xf32> to vector<16xf32>
    %173 = vector.shape_cast %172 : vector<16xf32> to vector<16x1xf32>
    %cst_59 = arith.constant 3.200000e+01 : f32
    %174 = vector.broadcast %cst_59 : f32 to vector<16x1xf32>
    %175 = arith.divf %173, %174 : vector<16x1xf32>
    %176 = vector.broadcast %175 : vector<16x1xf32> to vector<16x32xf32>
    %177 = arith.subf %167, %176 : vector<16x32xf32>
    %178 = arith.mulf %177, %177 : vector<16x32xf32>
    %cst_60 = arith.constant dense<0.000000e+00> : vector<16xf32>
    %179 = vector.multi_reduction <add>, %178, %cst_60 [1] : vector<16x32xf32> to vector<16xf32>
    %180 = vector.shape_cast %179 : vector<16xf32> to vector<16x1xf32>
    %cst_61 = arith.constant 3.200000e+01 : f32
    %181 = vector.broadcast %cst_61 : f32 to vector<16x1xf32>
    %182 = arith.divf %180, %181 : vector<16x1xf32>
    %183 = vector.broadcast %175 : vector<16x1xf32> to vector<16x32xf32>
    %184 = arith.subf %167, %183 : vector<16x32xf32>
    %cst_62 = arith.constant 9.99999996E-13 : f32
    %185 = vector.broadcast %cst_62 : f32 to vector<16x1xf32>
    %186 = arith.addf %182, %185 : vector<16x1xf32>
    %187 = math.rsqrt %186 : vector<16x1xf32>
    %188 = vector.broadcast %187 : vector<16x1xf32> to vector<16x32xf32>
    %189 = arith.mulf %184, %188 : vector<16x32xf32>
    %190 = vector.broadcast %169 : vector<1x32xf32> to vector<16x32xf32>
    %191 = arith.mulf %189, %190 : vector<16x32xf32>
    %192 = vector.broadcast %171 : vector<1x32xf32> to vector<16x32xf32>
    %193 = arith.addf %191, %192 : vector<16x32xf32>
    %c0_63 = arith.constant 0 : index
    %c0_64 = arith.constant 0 : index
    %194 = vector.load %arg20[%c0_63, %c0_64] : memref<16x32xf32, #tpu.memory_space<vmem>>, vector<16x32xf32>
    tpu.vector_store %arg20[%c0_63, %c0_64], %193 {strides = array<i32>} : memref<16x32xf32, #tpu.memory_space<vmem>>, vector<16x32xf32>,
    %c1_i32 = arith.constant 1 : i32
    %195 = arith.cmpi eq, %arg0, %c1_i32 : i32
    %196 = arith.extui %195 : i1 to i32
    %c0_i32_65 = arith.constant 0 : i32
    %197 = arith.cmpi ne, %196, %c0_i32_65 : i32
    scf.if %197 {
      %198 = arith.truncf %193 : vector<16x32xf32> to vector<16x32xbf16>
      %c0_66 = arith.constant 0 : index
      %c0_67 = arith.constant 0 : index
      %199 = vector.load %arg17[%c0_66, %c0_67] : memref<32x768xbf16, #tpu.memory_space<vmem>>, vector<32x768xbf16>
      %cst_68 = arith.constant dense<0.000000e+00> : vector<16x768xf32>
      %200 = tpu.matmul %198, %199, %cst_68 {dimension_numbers = #tpu.dot_dimension_numbers<[1], [0], [0], [1], [0, 0, 1, 1], [], []>} : vector<16x32xbf16>, vector<32x768xbf16>, vector<16x768xf32> -> vector<16x768xf32>
      %201 = vector.extract_strided_slice %200 {offsets = [2, 0], sizes = [5, 128], strides = [1, 1]} : vector<16x768xf32> to vector<5x128xf32>
      %cst_69 = arith.constant 0.000000e+00 : f32
      %202 = vector.broadcast %cst_69 : f32 to vector<5x128xf32>
      %203 = tpu.concatenate %201, %202 in 0 : vector<5x128xf32>, vector<5x128xf32> -> vector<10x128xf32>
      %204 = vector.extract_strided_slice %200 {offsets = [2, 128], sizes = [5, 128], strides = [1, 1]} : vector<16x768xf32> to vector<5x128xf32>
      %cst_70 = arith.constant 0.000000e+00 : f32
      %205 = vector.broadcast %cst_70 : f32 to vector<1x128xf32>
      %cst_71 = arith.constant 0.000000e+00 : f32
      %206 = vector.broadcast %cst_71 : f32 to vector<4x128xf32>
      %207 = tpu.concatenate %205, %204, %206 in 0 : vector<1x128xf32>, vector<5x128xf32>, vector<4x128xf32> -> vector<10x128xf32>
      %208 = arith.addf %203, %207 : vector<10x128xf32>
      %209 = vector.extract_strided_slice %200 {offsets = [2, 256], sizes = [5, 128], strides = [1, 1]} : vector<16x768xf32> to vector<5x128xf32>
      %cst_72 = arith.constant 0.000000e+00 : f32
      %210 = vector.broadcast %cst_72 : f32 to vector<2x128xf32>
      %cst_73 = arith.constant 0.000000e+00 : f32
      %211 = vector.broadcast %cst_73 : f32 to vector<3x128xf32>
      %212 = tpu.concatenate %210, %209, %211 in 0 : vector<2x128xf32>, vector<5x128xf32>, vector<3x128xf32> -> vector<10x128xf32>
      %213 = arith.addf %208, %212 : vector<10x128xf32>
      %214 = vector.extract_strided_slice %200 {offsets = [2, 384], sizes = [5, 128], strides = [1, 1]} : vector<16x768xf32> to vector<5x128xf32>
      %cst_74 = arith.constant 0.000000e+00 : f32
      %215 = vector.broadcast %cst_74 : f32 to vector<3x128xf32>
      %cst_75 = arith.constant 0.000000e+00 : f32
      %216 = vector.broadcast %cst_75 : f32 to vector<2x128xf32>
      %217 = tpu.concatenate %215, %214, %216 in 0 : vector<3x128xf32>, vector<5x128xf32>, vector<2x128xf32> -> vector<10x128xf32>
      %218 = arith.addf %213, %217 : vector<10x128xf32>
      %219 = vector.extract_strided_slice %200 {offsets = [2, 512], sizes = [5, 128], strides = [1, 1]} : vector<16x768xf32> to vector<5x128xf32>
      %cst_76 = arith.constant 0.000000e+00 : f32
      %220 = vector.broadcast %cst_76 : f32 to vector<4x128xf32>
      %cst_77 = arith.constant 0.000000e+00 : f32
      %221 = vector.broadcast %cst_77 : f32 to vector<1x128xf32>
      %222 = tpu.concatenate %220, %219, %221 in 0 : vector<4x128xf32>, vector<5x128xf32>, vector<1x128xf32> -> vector<10x128xf32>
      %223 = arith.addf %218, %222 : vector<10x128xf32>
      %224 = vector.extract_strided_slice %200 {offsets = [2, 640], sizes = [5, 128], strides = [1, 1]} : vector<16x768xf32> to vector<5x128xf32>
      %cst_78 = arith.constant 0.000000e+00 : f32
      %225 = vector.broadcast %cst_78 : f32 to vector<5x128xf32>
      %226 = tpu.concatenate %225, %224 in 0 : vector<5x128xf32>, vector<5x128xf32> -> vector<10x128xf32>
      %227 = arith.addf %223, %226 : vector<10x128xf32>
      %228 = vector.extract_strided_slice %227 {offsets = [0, 0], sizes = [10, 4], strides = [1, 1]} : vector<10x128xf32> to vector<10x4xf32>
      %c0_79 = arith.constant 0 : index
      %c0_80 = arith.constant 0 : index
      %229 = vector.load %arg18[%c0_79, %c0_80] : memref<1x4xf32, #tpu.memory_space<vmem>>, vector<1x4xf32>
      %230 = vector.broadcast %229 : vector<1x4xf32> to vector<10x4xf32>
      %231 = arith.addf %228, %230 : vector<10x4xf32>
      %c0_81 = arith.constant 0 : index
      %c0_82 = arith.constant 0 : index
      %c0_83 = arith.constant 0 : index
      %232 = vector.load %arg19[%c0_81, %c0_82, %c0_83] : memref<2x10x4xf32, #tpu.memory_space<vmem>>, vector<1x10x4xf32>
      %233 = vector.shape_cast %232 : vector<1x10x4xf32> to vector<10x4xf32>
      %234 = vector.shape_cast %231 : vector<10x4xf32> to vector<1x10x4xf32>
      tpu.vector_store %arg19[%c0_81, %c0_82, %c0_83], %234 {strides = array<i32>} : memref<2x10x4xf32, #tpu.memory_space<vmem>>, vector<1x10x4xf32>,
      %235 = vector.extract_strided_slice %200 {offsets = [10, 0], sizes = [5, 128], strides = [1, 1]} : vector<16x768xf32> to vector<5x128xf32>
      %cst_84 = arith.constant 0.000000e+00 : f32
      %236 = vector.broadcast %cst_84 : f32 to vector<5x128xf32>
      %237 = tpu.concatenate %235, %236 in 0 : vector<5x128xf32>, vector<5x128xf32> -> vector<10x128xf32>
      %238 = vector.extract_strided_slice %200 {offsets = [10, 128], sizes = [5, 128], strides = [1, 1]} : vector<16x768xf32> to vector<5x128xf32>
      %cst_85 = arith.constant 0.000000e+00 : f32
      %239 = vector.broadcast %cst_85 : f32 to vector<1x128xf32>
      %cst_86 = arith.constant 0.000000e+00 : f32
      %240 = vector.broadcast %cst_86 : f32 to vector<4x128xf32>
      %241 = tpu.concatenate %239, %238, %240 in 0 : vector<1x128xf32>, vector<5x128xf32>, vector<4x128xf32> -> vector<10x128xf32>
      %242 = arith.addf %237, %241 : vector<10x128xf32>
      %243 = vector.extract_strided_slice %200 {offsets = [10, 256], sizes = [5, 128], strides = [1, 1]} : vector<16x768xf32> to vector<5x128xf32>
      %cst_87 = arith.constant 0.000000e+00 : f32
      %244 = vector.broadcast %cst_87 : f32 to vector<2x128xf32>
      %cst_88 = arith.constant 0.000000e+00 : f32
      %245 = vector.broadcast %cst_88 : f32 to vector<3x128xf32>
      %246 = tpu.concatenate %244, %243, %245 in 0 : vector<2x128xf32>, vector<5x128xf32>, vector<3x128xf32> -> vector<10x128xf32>
      %247 = arith.addf %242, %246 : vector<10x128xf32>
      %248 = vector.extract_strided_slice %200 {offsets = [10, 384], sizes = [5, 128], strides = [1, 1]} : vector<16x768xf32> to vector<5x128xf32>
      %cst_89 = arith.constant 0.000000e+00 : f32
      %249 = vector.broadcast %cst_89 : f32 to vector<3x128xf32>
      %cst_90 = arith.constant 0.000000e+00 : f32
      %250 = vector.broadcast %cst_90 : f32 to vector<2x128xf32>
      %251 = tpu.concatenate %249, %248, %250 in 0 : vector<3x128xf32>, vector<5x128xf32>, vector<2x128xf32> -> vector<10x128xf32>
      %252 = arith.addf %247, %251 : vector<10x128xf32>
      %253 = vector.extract_strided_slice %200 {offsets = [10, 512], sizes = [5, 128], strides = [1, 1]} : vector<16x768xf32> to vector<5x128xf32>
      %cst_91 = arith.constant 0.000000e+00 : f32
      %254 = vector.broadcast %cst_91 : f32 to vector<4x128xf32>
      %cst_92 = arith.constant 0.000000e+00 : f32
      %255 = vector.broadcast %cst_92 : f32 to vector<1x128xf32>
      %256 = tpu.concatenate %254, %253, %255 in 0 : vector<4x128xf32>, vector<5x128xf32>, vector<1x128xf32> -> vector<10x128xf32>
      %257 = arith.addf %252, %256 : vector<10x128xf32>
      %258 = vector.extract_strided_slice %200 {offsets = [10, 640], sizes = [5, 128], strides = [1, 1]} : vector<16x768xf32> to vector<5x128xf32>
      %cst_93 = arith.constant 0.000000e+00 : f32
      %259 = vector.broadcast %cst_93 : f32 to vector<5x128xf32>
      %260 = tpu.concatenate %259, %258 in 0 : vector<5x128xf32>, vector<5x128xf32> -> vector<10x128xf32>
      %261 = arith.addf %257, %260 : vector<10x128xf32>
      %262 = vector.extract_strided_slice %261 {offsets = [0, 0], sizes = [10, 4], strides = [1, 1]} : vector<10x128xf32> to vector<10x4xf32>
      %c0_94 = arith.constant 0 : index
      %c0_95 = arith.constant 0 : index
      %263 = vector.load %arg18[%c0_94, %c0_95] : memref<1x4xf32, #tpu.memory_space<vmem>>, vector<1x4xf32>
      %264 = vector.broadcast %263 : vector<1x4xf32> to vector<10x4xf32>
      %265 = arith.addf %262, %264 : vector<10x4xf32>
      %c1 = arith.constant 1 : index
      %c0_96 = arith.constant 0 : index
      %c0_97 = arith.constant 0 : index
      %266 = vector.load %arg19[%c1, %c0_96, %c0_97] : memref<2x10x4xf32, #tpu.memory_space<vmem>>, vector<1x10x4xf32>
      %267 = vector.shape_cast %266 : vector<1x10x4xf32> to vector<10x4xf32>
      %268 = vector.shape_cast %265 : vector<10x4xf32> to vector<1x10x4xf32>
      tpu.vector_store %arg19[%c1, %c0_96, %c0_97], %268 {strides = array<i32>} : memref<2x10x4xf32, #tpu.memory_space<vmem>>, vector<1x10x4xf32>,
    } else {
    }
    return
  }
  func.func @transform_0(%arg0: i32) -> (i32, i32) {
    %c0_i32 = arith.constant 0 : i32
    %c0_i32_0 = arith.constant 0 : i32
    %c0_i32_1 = arith.constant 0 : i32
    return %c0_i32, %c0_i32_0 : i32, i32
  }
  func.func @transform_1(%arg0: i32) -> (i32, i32, i32) {
    %c0_i32 = arith.constant 0 : i32
    %c0_i32_0 = arith.constant 0 : i32
    %c0_i32_1 = arith.constant 0 : i32
    %c0_i32_2 = arith.constant 0 : i32
    return %c0_i32, %c0_i32_0, %c0_i32_1 : i32, i32, i32
  }
  func.func @transform_2(%arg0: i32) -> (i32, i32) {
    %c0_i32 = arith.constant 0 : i32
    %c0_i32_0 = arith.constant 0 : i32
    %c0_i32_1 = arith.constant 0 : i32
    return %c0_i32, %c0_i32_0 : i32, i32
  }
  func.func @transform_3(%arg0: i32) -> (i32, i32) {
    %c0_i32 = arith.constant 0 : i32
    %c0_i32_0 = arith.constant 0 : i32
    %c0_i32_1 = arith.constant 0 : i32
    return %c0_i32, %c0_i32_0 : i32, i32
  }
  func.func @transform_4(%arg0: i32) -> (i32, i32, i32) {
    %c0_i32 = arith.constant 0 : i32
    %c0_i32_0 = arith.constant 0 : i32
    %c0_i32_1 = arith.constant 0 : i32
    return %arg0, %c0_i32, %c0_i32_0 : i32, i32, i32
  }
  func.func @transform_5(%arg0: i32) -> (i32, i32, i32) {
    %c0_i32 = arith.constant 0 : i32
    %c0_i32_0 = arith.constant 0 : i32
    %c0_i32_1 = arith.constant 0 : i32
    return %arg0, %c0_i32, %c0_i32_0 : i32, i32, i32
  }
  func.func @transform_6(%arg0: i32) -> (i32, i32, i32) {
    %c0_i32 = arith.constant 0 : i32
    %c0_i32_0 = arith.constant 0 : i32
    %c0_i32_1 = arith.constant 0 : i32
    return %arg0, %c0_i32, %c0_i32_0 : i32, i32, i32
  }
  func.func @transform_7(%arg0: i32) -> (i32, i32, i32) {
    %c0_i32 = arith.constant 0 : i32
    %c0_i32_0 = arith.constant 0 : i32
    %c0_i32_1 = arith.constant 0 : i32
    return %arg0, %c0_i32, %c0_i32_0 : i32, i32, i32
  }
  func.func @transform_8(%arg0: i32) -> (i32, i32, i32) {
    %c0_i32 = arith.constant 0 : i32
    %c0_i32_0 = arith.constant 0 : i32
    %c0_i32_1 = arith.constant 0 : i32
    return %arg0, %c0_i32, %c0_i32_0 : i32, i32, i32
  }
  func.func @transform_9(%arg0: i32) -> (i32, i32, i32) {
    %c0_i32 = arith.constant 0 : i32
    %c0_i32_0 = arith.constant 0 : i32
    %c0_i32_1 = arith.constant 0 : i32
    return %arg0, %c0_i32, %c0_i32_0 : i32, i32, i32
  }
  func.func @transform_10(%arg0: i32) -> (i32, i32, i32) {
    %c0_i32 = arith.constant 0 : i32
    %c0_i32_0 = arith.constant 0 : i32
    %c0_i32_1 = arith.constant 0 : i32
    return %arg0, %c0_i32, %c0_i32_0 : i32, i32, i32
  }
  func.func @transform_11(%arg0: i32) -> (i32, i32, i32) {
    %c0_i32 = arith.constant 0 : i32
    %c0_i32_0 = arith.constant 0 : i32
    %c0_i32_1 = arith.constant 0 : i32
    return %arg0, %c0_i32, %c0_i32_0 : i32, i32, i32
  }
  func.func @transform_12(%arg0: i32) -> (i32, i32, i32) {
    %c0_i32 = arith.constant 0 : i32
    %c0_i32_0 = arith.constant 0 : i32
    %c0_i32_1 = arith.constant 0 : i32
    return %arg0, %c0_i32, %c0_i32_0 : i32, i32, i32
  }
  func.func @transform_13(%arg0: i32) -> (i32, i32, i32) {
    %c0_i32 = arith.constant 0 : i32
    %c0_i32_0 = arith.constant 0 : i32
    %c0_i32_1 = arith.constant 0 : i32
    return %arg0, %c0_i32, %c0_i32_0 : i32, i32, i32
  }
  func.func @transform_14(%arg0: i32) -> (i32, i32, i32) {
    %c0_i32 = arith.constant 0 : i32
    %c0_i32_0 = arith.constant 0 : i32
    %c0_i32_1 = arith.constant 0 : i32
    return %arg0, %c0_i32, %c0_i32_0 : i32, i32, i32
  }
  func.func @transform_15(%arg0: i32) -> (i32, i32, i32) {
    %c0_i32 = arith.constant 0 : i32
    %c0_i32_0 = arith.constant 0 : i32
    %c0_i32_1 = arith.constant 0 : i32
    return %arg0, %c0_i32, %c0_i32_0 : i32, i32, i32
  }
  func.func @transform_16(%arg0: i32) -> (i32, i32) {
    %c0_i32 = arith.constant 0 : i32
    %c0_i32_0 = arith.constant 0 : i32
    %c0_i32_1 = arith.constant 0 : i32
    return %c0_i32, %c0_i32_0 : i32, i32
  }
  func.func @transform_17(%arg0: i32) -> (i32, i32) {
    %c0_i32 = arith.constant 0 : i32
    %c0_i32_0 = arith.constant 0 : i32
    %c0_i32_1 = arith.constant 0 : i32
    return %c0_i32, %c0_i32_0 : i32, i32
  }
  func.func @transform_18(%arg0: i32) -> (i32, i32, i32) {
    %c0_i32 = arith.constant 0 : i32
    %c0_i32_0 = arith.constant 0 : i32
    %c0_i32_1 = arith.constant 0 : i32
    %c0_i32_2 = arith.constant 0 : i32
    return %c0_i32, %c0_i32_0, %c0_i32_1 : i32, i32, i32
  }
}

</mosaic_0001>

<llo_original>
// kernel: tpu_custom_call.1
$region0: #{tpu_custom_call.1}
  #allocation0 [shape = 'u32[]', space=smem, size = 0x4, offset = 0x4, fixed_abs, tag = 'smem constant byte address 0x4 - core index']
  #allocation1 [shape = 'u32[72,128]{1,0:T(1,128)}', space=vmem, size = 0x9000, scoped, tag = 'internal scratch']
  #allocation2 [shape = 'f32[16,32]{1,0:T(8,128)}', space=vmem, size = 0x2000, scoped, tag = 'scratch operand']
  %s0 = inlined_call_operand.hbm [shape: f32[16,32], index: 0, kind: input, shape index: {}]
  %s1 = inlined_call_operand.vmem [shape: f32[8,1,8], index: 1, kind: input, shape index: {}]
  %s2 = inlined_call_operand.vmem [shape: f32[1,32], index: 2, kind: input, shape index: {}]
  %s3 = inlined_call_operand.hbm [shape: f32[1,32], index: 3, kind: input, shape index: {}]
  %s4 = inlined_call_operand.hbm [shape: bf16[2,32,96], index: 4, kind: input, shape index: {}]
  %s5 = inlined_call_operand.vmem [shape: f32[2,1,96], index: 5, kind: input, shape index: {}]
  %s6 = inlined_call_operand.hbm [shape: bf16[2,32,32], index: 6, kind: input, shape index: {}]
  %s7 = inlined_call_operand.vmem [shape: f32[2,1,32], index: 7, kind: input, shape index: {}]
  %s8 = inlined_call_operand.vmem [shape: f32[2,1,32], index: 8, kind: input, shape index: {}]
  %s9 = inlined_call_operand.hbm [shape: f32[2,1,32], index: 9, kind: input, shape index: {}]
  %s10 = inlined_call_operand.hbm [shape: bf16[2,32,64], index: 10, kind: input, shape index: {}]
  %s11 = inlined_call_operand.hbm [shape: f32[2,1,64], index: 11, kind: input, shape index: {}]
  %s12 = inlined_call_operand.vmem [shape: bf16[2,64,32], index: 12, kind: input, shape index: {}]
  %s13 = inlined_call_operand.hbm [shape: f32[2,1,32], index: 13, kind: input, shape index: {}]
  %s14 = inlined_call_operand.hbm [shape: f32[2,1,32], index: 14, kind: input, shape index: {}]
  %s15 = inlined_call_operand.hbm [shape: f32[2,1,32], index: 15, kind: input, shape index: {}]
  %s16 = inlined_call_operand.vmem [shape: bf16[32,768], index: 16, kind: input, shape index: {}]
  %s17 = inlined_call_operand.hbm [shape: f32[1,4], index: 17, kind: input, shape index: {}]
  %s18 = inlined_call_operand.vmem [shape: f32[2,10,4], index: 18, kind: output, shape index: {}]
  %s19 = sld [smem:[#allocation0]]
  $region157: #{tpu_custom_call.1} parent=0
    _
  %s21 = ssub.s32 1, %s19
  %s22 = scalar_select 0, %s21, %s19
  $region1: #{tpu_custom_call.1} parent=0
    #allocation3 [shape = 'u8[8192]{0}', space=vmem, size = 0x2000, scoped, tag = 'input window, operand 0, single buffered']
    #allocation4 [shape = 's32[2]{0}', space=sflag, size = 0x8, scoped, tag = 'scoped memory for tpu_custom_call.1']
    #allocation5 [shape = 'u8[512]{0}', space=vmem, size = 0x400, scoped, tag = 'input window, operand 3, single buffered']
    #allocation6 [shape = 's32[1]{0}', space=sflag, size = 0x4, scoped, tag = 'scoped memory for tpu_custom_call.1']
    #allocation7 [shape = 'u8[16384]{0}', space=vmem, size = 0x4000, scoped, tag = 'input window, operand 4']
    #allocation8 [shape = 'u8[16384]{0}', space=vmem, size = 0x4000, scoped, tag = 'input window, operand 6']
    #allocation9 [shape = 'u8[1024]{0}', space=vmem, size = 0x400, scoped, tag = 'input window, operand 9']
    #allocation10 [shape = 'u8[16384]{0}', space=vmem, size = 0x4000, scoped, tag = 'input window, operand 10']
    #allocation11 [shape = 'u8[1024]{0}', space=vmem, size = 0x400, scoped, tag = 'input window, operand 11']
    #allocation12 [shape = 'u8[1024]{0}', space=vmem, size = 0x400, scoped, tag = 'input window, operand 13']
    #allocation13 [shape = 'u8[1024]{0}', space=vmem, size = 0x400, scoped, tag = 'input window, operand 14']
    #allocation14 [shape = 'u8[1024]{0}', space=vmem, size = 0x400, scoped, tag = 'input window, operand 15']
    #allocation15 [shape = 'u8[512]{0}', space=vmem, size = 0x400, scoped, tag = 'input window, operand 17, single buffered']
    %23 = vsyncpa [#allocation4], 0
    %24 = vsyncpa [#allocation6], 0
    loop: start=0, step=1, limit=4
    $region2: #{tpu_custom_call.1} parent=1 // loop_pre_header
      _
    $region3: #{tpu_custom_call.1} parent=1 // loop_header
      %s26 = sphi 0, %s30
      %p27 = scmp.ge.s32.totalorder %s26, 4
      %s34 = sphi 0, %s34
      %s36 = sphi 0, %s34
      %s37 = sphi 0, %s36
      %s51 = sphi 0, %s37
      %s55 = sphi 0, %s55
      %s57 = sphi 0, %s55
      %s58 = sphi 0, %s57
      %s72 = sphi 0, %s58
      %s76 = sphi 0, %s76
      %s78 = sphi 0, %s76
      %s79 = sphi 0, %s78
      %s93 = sphi 0, %s79
      %s97 = sphi 0, %s97
      %s99 = sphi 0, %s97
      %s100 = sphi 0, %s99
      %s114 = sphi 0, %s100
      %s120 = sphi 0, %s122
      %s123 = sphi 0, %s120
      %s124 = sphi 0, %s123
      %s140 = sphi 0, %s124
      %s146 = sphi 0, %s148
      %s149 = sphi 0, %s146
      %s150 = sphi 0, %s149
      %s166 = sphi 0, %s150
      %s172 = sphi 0, %s174
      %s175 = sphi 0, %s172
      %s176 = sphi 0, %s175
      %s192 = sphi 0, %s176
      %s198 = sphi 0, %s200
      %s201 = sphi 0, %s198
      %s202 = sphi 0, %s201
      %s218 = sphi 0, %s202
      %s224 = sphi 0, %s226
      %s227 = sphi 0, %s224
      %s228 = sphi 0, %s227
      %s244 = sphi 0, %s228
      %s250 = sphi 0, %s252
      %s253 = sphi 0, %s250
      %s254 = sphi 0, %s253
      %s270 = sphi 0, %s254
      %s276 = sphi 0, %s278
      %s279 = sphi 0, %s276
      %s280 = sphi 0, %s279
      %s296 = sphi 0, %s280
      %s302 = sphi 0, %s304
      %s305 = sphi 0, %s302
      %s306 = sphi 0, %s305
      %s322 = sphi 0, %s306
      %s328 = sphi 0, %s330
      %s331 = sphi 0, %s328
      %s332 = sphi 0, %s331
      %s348 = sphi 0, %s332
      %s354 = sphi 0, %s356
      %s357 = sphi 0, %s354
      %s358 = sphi 0, %s357
      %s374 = sphi 0, %s358
      %s380 = sphi 0, %s382
      %s383 = sphi 0, %s380
      %s384 = sphi 0, %s383
      %s400 = sphi 0, %s384
      %s406 = sphi 0, %s408
      %s409 = sphi 0, %s406
      %s410 = sphi 0, %s409
      %s426 = sphi 0, %s410
      %s430 = sphi 0, %s430
      %s432 = sphi 0, %s430
      %s433 = sphi 0, %s432
      %s447 = sphi 0, %s433
      %s451 = sphi 0, %s451
      %s453 = sphi 0, %s451
      %s454 = sphi 0, %s453
      %s468 = sphi 0, %s454
      %s472 = sphi 0, %s472
      %s474 = sphi 0, %s472
      %s475 = sphi 0, %s474
      %s489 = sphi 0, %s475
    $region4: #{tpu_custom_call.1} parent=1 // loop_header_branch
      %29 = sbr.rel (%p27) target = $region8
    $region5: #{tpu_custom_call.1} parent=1 // loop_body
      %s31 = ssub.s32 %s26, 1
      %s32 = ssub.s32 %s26, 2
      %s33 = sadd.s32 %s26, 1
      %s35 = sadd.s32 %s34, 1
      %p38 = scmp.eq.s32.totalorder %s26, 1
      %p39 = scmp.ne.s32.totalorder %s34, %s36
      %p40 = scmp.eq.s32.totalorder %s26, 0
      %p41 = por %p39, %p40
      %p42 = scmp.ne.s32.totalorder %s34, %s36
      %p43 = scmp.eq.s32.totalorder %s31, 1
      %p44 = por %p42, %p43
      %p45 = scmp.ne.s32.totalorder %s36, %s37
      %p46 = scmp.eq.s32.totalorder %s31, 0
      %p47 = por %p45, %p46
      %p48 = scmp.ne.s32.totalorder %s36, %s37
      %p49 = scmp.eq.s32.totalorder %s32, 1
      %p50 = por %p48, %p49
      %p52 = scmp.ne.s32.totalorder %s37, %s51
      %p53 = scmp.eq.s32.totalorder %s32, 0
      %p54 = por %p52, %p53
      %s56 = sadd.s32 %s55, 1
      %p59 = scmp.eq.s32.totalorder %s26, 1
      %p60 = scmp.ne.s32.totalorder %s55, %s57
      %p61 = scmp.eq.s32.totalorder %s26, 0
      %p62 = por %p60, %p61
      %p63 = scmp.ne.s32.totalorder %s55, %s57
      %p64 = scmp.eq.s32.totalorder %s31, 1
      %p65 = por %p63, %p64
      %p66 = scmp.ne.s32.totalorder %s57, %s58
      %p67 = scmp.eq.s32.totalorder %s31, 0
      %p68 = por %p66, %p67
      %p69 = scmp.ne.s32.totalorder %s57, %s58
      %p70 = scmp.eq.s32.totalorder %s32, 1
      %p71 = por %p69, %p70
      %p73 = scmp.ne.s32.totalorder %s58, %s72
      %p74 = scmp.eq.s32.totalorder %s32, 0
      %p75 = por %p73, %p74
      %s77 = sadd.s32 %s76, 1
      %p80 = scmp.eq.s32.totalorder %s26, 1
      %p81 = scmp.ne.s32.totalorder %s76, %s78
      %p82 = scmp.eq.s32.totalorder %s26, 0
      %p83 = por %p81, %p82
      %p84 = scmp.ne.s32.totalorder %s76, %s78
      %p85 = scmp.eq.s32.totalorder %s31, 1
      %p86 = por %p84, %p85
      %p87 = scmp.ne.s32.totalorder %s78, %s79
      %p88 = scmp.eq.s32.totalorder %s31, 0
      %p89 = por %p87, %p88
      %p90 = scmp.ne.s32.totalorder %s78, %s79
      %p91 = scmp.eq.s32.totalorder %s32, 1
      %p92 = por %p90, %p91
      %p94 = scmp.ne.s32.totalorder %s79, %s93
      %p95 = scmp.eq.s32.totalorder %s32, 0
      %p96 = por %p94, %p95
      %s98 = sadd.s32 %s97, 1
      %p101 = scmp.eq.s32.totalorder %s26, 1
      %p102 = scmp.ne.s32.totalorder %s97, %s99
      %p103 = scmp.eq.s32.totalorder %s26, 0
      %p104 = por %p102, %p103
      %p105 = scmp.ne.s32.totalorder %s97, %s99
      %p106 = scmp.eq.s32.totalorder %s31, 1
      %p107 = por %p105, %p106
      %p108 = scmp.ne.s32.totalorder %s99, %s100
      %p109 = scmp.eq.s32.totalorder %s31, 0
      %p110 = por %p108, %p109
      %p111 = scmp.ne.s32.totalorder %s99, %s100
      %p112 = scmp.eq.s32.totalorder %s32, 1
      %p113 = por %p111, %p112
      %p115 = scmp.ne.s32.totalorder %s100, %s114
      %p116 = scmp.eq.s32.totalorder %s32, 0
      %p117 = por %p115, %p116
      %s118 = ssub.s32 %s26, %s33
      %p119 = scmp.eq.s32.totalorder %s118, 0
      %s121 = sadd.s32 %s120, 1
      %s122 = scalar_select %p119, %s120, %s121
      %p125 = pneg %p119
      %p126 = scmp.eq.s32.totalorder %s26, 1
      %p127 = por %p125, %p126
      %p128 = scmp.ne.s32.totalorder %s120, %s123
      %p129 = scmp.eq.s32.totalorder %s26, 0
      %p130 = por %p128, %p129
      %p131 = scmp.ne.s32.totalorder %s120, %s123
      %p132 = scmp.eq.s32.totalorder %s31, 1
      %p133 = por %p131, %p132
      %p134 = scmp.ne.s32.totalorder %s123, %s124
      %p135 = scmp.eq.s32.totalorder %s31, 0
      %p136 = por %p134, %p135
      %p137 = scmp.ne.s32.totalorder %s123, %s124
      %p138 = scmp.eq.s32.totalorder %s32, 1
      %p139 = por %p137, %p138
      %p141 = scmp.ne.s32.totalorder %s124, %s140
      %p142 = scmp.eq.s32.totalorder %s32, 0
      %p143 = por %p141, %p142
      %s144 = ssub.s32 %s26, %s33
      %p145 = scmp.eq.s32.totalorder %s144, 0
      %s147 = sadd.s32 %s146, 1
      %s148 = scalar_select %p145, %s146, %s147
      %p151 = pneg %p145
      %p152 = scmp.eq.s32.totalorder %s26, 1
      %p153 = por %p151, %p152
      %p154 = scmp.ne.s32.totalorder %s146, %s149
      %p155 = scmp.eq.s32.totalorder %s26, 0
      %p156 = por %p154, %p155
      %p157 = scmp.ne.s32.totalorder %s146, %s149
      %p158 = scmp.eq.s32.totalorder %s31, 1
      %p159 = por %p157, %p158
      %p160 = scmp.ne.s32.totalorder %s149, %s150
      %p161 = scmp.eq.s32.totalorder %s31, 0
      %p162 = por %p160, %p161
      %p163 = scmp.ne.s32.totalorder %s149, %s150
      %p164 = scmp.eq.s32.totalorder %s32, 1
      %p165 = por %p163, %p164
      %p167 = scmp.ne.s32.totalorder %s150, %s166
      %p168 = scmp.eq.s32.totalorder %s32, 0
      %p169 = por %p167, %p168
      %s170 = ssub.s32 %s26, %s33
      %p171 = scmp.eq.s32.totalorder %s170, 0
      %s173 = sadd.s32 %s172, 1
      %s174 = scalar_select %p171, %s172, %s173
      %p177 = pneg %p171
      %p178 = scmp.eq.s32.totalorder %s26, 1
      %p179 = por %p177, %p178
      %p180 = scmp.ne.s32.totalorder %s172, %s175
      %p181 = scmp.eq.s32.totalorder %s26, 0
      %p182 = por %p180, %p181
      %p183 = scmp.ne.s32.totalorder %s172, %s175
      %p184 = scmp.eq.s32.totalorder %s31, 1
      %p185 = por %p183, %p184
      %p186 = scmp.ne.s32.totalorder %s175, %s176
      %p187 = scmp.eq.s32.totalorder %s31, 0
      %p188 = por %p186, %p187
      %p189 = scmp.ne.s32.totalorder %s175, %s176
      %p190 = scmp.eq.s32.totalorder %s32, 1
      %p191 = por %p189, %p190
      %p193 = scmp.ne.s32.totalorder %s176, %s192
      %p194 = scmp.eq.s32.totalorder %s32, 0
      %p195 = por %p193, %p194
      %s196 = ssub.s32 %s26, %s33
      %p197 = scmp.eq.s32.totalorder %s196, 0
      %s199 = sadd.s32 %s198, 1
      %s200 = scalar_select %p197, %s198, %s199
      %p203 = pneg %p197
      %p204 = scmp.eq.s32.totalorder %s26, 1
      %p205 = por %p203, %p204
      %p206 = scmp.ne.s32.totalorder %s198, %s201
      %p207 = scmp.eq.s32.totalorder %s26, 0
      %p208 = por %p206, %p207
      %p209 = scmp.ne.s32.totalorder %s198, %s201
      %p210 = scmp.eq.s32.totalorder %s31, 1
      %p211 = por %p209, %p210
      %p212 = scmp.ne.s32.totalorder %s201, %s202
      %p213 = scmp.eq.s32.totalorder %s31, 0
      %p214 = por %p212, %p213
      %p215 = scmp.ne.s32.totalorder %s201, %s202
      %p216 = scmp.eq.s32.totalorder %s32, 1
      %p217 = por %p215, %p216
      %p219 = scmp.ne.s32.totalorder %s202, %s218
      %p220 = scmp.eq.s32.totalorder %s32, 0
      %p221 = por %p219, %p220
      %s222 = ssub.s32 %s26, %s33
      %p223 = scmp.eq.s32.totalorder %s222, 0
      %s225 = sadd.s32 %s224, 1
      %s226 = scalar_select %p223, %s224, %s225
      %p229 = pneg %p223
      %p230 = scmp.eq.s32.totalorder %s26, 1
      %p231 = por %p229, %p230
      %p232 = scmp.ne.s32.totalorder %s224, %s227
      %p233 = scmp.eq.s32.totalorder %s26, 0
      %p234 = por %p232, %p233
      %p235 = scmp.ne.s32.totalorder %s224, %s227
      %p236 = scmp.eq.s32.totalorder %s31, 1
      %p237 = por %p235, %p236
      %p238 = scmp.ne.s32.totalorder %s227, %s228
      %p239 = scmp.eq.s32.totalorder %s31, 0
      %p240 = por %p238, %p239
      %p241 = scmp.ne.s32.totalorder %s227, %s228
      %p242 = scmp.eq.s32.totalorder %s32, 1
      %p243 = por %p241, %p242
      %p245 = scmp.ne.s32.totalorder %s228, %s244
      %p246 = scmp.eq.s32.totalorder %s32, 0
      %p247 = por %p245, %p246
      %s248 = ssub.s32 %s26, %s33
      %p249 = scmp.eq.s32.totalorder %s248, 0
      %s251 = sadd.s32 %s250, 1
      %s252 = scalar_select %p249, %s250, %s251
      %p255 = pneg %p249
      %p256 = scmp.eq.s32.totalorder %s26, 1
      %p257 = por %p255, %p256
      %p258 = scmp.ne.s32.totalorder %s250, %s253
      %p259 = scmp.eq.s32.totalorder %s26, 0
      %p260 = por %p258, %p259
      %p261 = scmp.ne.s32.totalorder %s250, %s253
      %p262 = scmp.eq.s32.totalorder %s31, 1
      %p263 = por %p261, %p262
      %p264 = scmp.ne.s32.totalorder %s253, %s254
      %p265 = scmp.eq.s32.totalorder %s31, 0
      %p266 = por %p264, %p265
      %p267 = scmp.ne.s32.totalorder %s253, %s254
      %p268 = scmp.eq.s32.totalorder %s32, 1
      %p269 = por %p267, %p268
      %p271 = scmp.ne.s32.totalorder %s254, %s270
      %p272 = scmp.eq.s32.totalorder %s32, 0
      %p273 = por %p271, %p272
      %s274 = ssub.s32 %s26, %s33
      %p275 = scmp.eq.s32.totalorder %s274, 0
      %s277 = sadd.s32 %s276, 1
      %s278 = scalar_select %p275, %s276, %s277
      %p281 = pneg %p275
      %p282 = scmp.eq.s32.totalorder %s26, 1
      %p283 = por %p281, %p282
      %p284 = scmp.ne.s32.totalorder %s276, %s279
      %p285 = scmp.eq.s32.totalorder %s26, 0
      %p286 = por %p284, %p285
      %p287 = scmp.ne.s32.totalorder %s276, %s279
      %p288 = scmp.eq.s32.totalorder %s31, 1
      %p289 = por %p287, %p288
      %p290 = scmp.ne.s32.totalorder %s279, %s280
      %p291 = scmp.eq.s32.totalorder %s31, 0
      %p292 = por %p290, %p291
      %p293 = scmp.ne.s32.totalorder %s279, %s280
      %p294 = scmp.eq.s32.totalorder %s32, 1
      %p295 = por %p293, %p294
      %p297 = scmp.ne.s32.totalorder %s280, %s296
      %p298 = scmp.eq.s32.totalorder %s32, 0
      %p299 = por %p297, %p298
      %s300 = ssub.s32 %s26, %s33
      %p301 = scmp.eq.s32.totalorder %s300, 0
      %s303 = sadd.s32 %s302, 1
      %s304 = scalar_select %p301, %s302, %s303
      %p307 = pneg %p301
      %p308 = scmp.eq.s32.totalorder %s26, 1
      %p309 = por %p307, %p308
      %p310 = scmp.ne.s32.totalorder %s302, %s305
      %p311 = scmp.eq.s32.totalorder %s26, 0
      %p312 = por %p310, %p311
      %p313 = scmp.ne.s32.totalorder %s302, %s305
      %p314 = scmp.eq.s32.totalorder %s31, 1
      %p315 = por %p313, %p314
      %p316 = scmp.ne.s32.totalorder %s305, %s306
      %p317 = scmp.eq.s32.totalorder %s31, 0
      %p318 = por %p316, %p317
      %p319 = scmp.ne.s32.totalorder %s305, %s306
      %p320 = scmp.eq.s32.totalorder %s32, 1
      %p321 = por %p319, %p320
      %p323 = scmp.ne.s32.totalorder %s306, %s322
      %p324 = scmp.eq.s32.totalorder %s32, 0
      %p325 = por %p323, %p324
      %s326 = ssub.s32 %s26, %s33
      %p327 = scmp.eq.s32.totalorder %s326, 0
      %s329 = sadd.s32 %s328, 1
      %s330 = scalar_select %p327, %s328, %s329
      %p333 = pneg %p327
      %p334 = scmp.eq.s32.totalorder %s26, 1
      %p335 = por %p333, %p334
      %p336 = scmp.ne.s32.totalorder %s328, %s331
      %p337 = scmp.eq.s32.totalorder %s26, 0
      %p338 = por %p336, %p337
      %p339 = scmp.ne.s32.totalorder %s328, %s331
      %p340 = scmp.eq.s32.totalorder %s31, 1
      %p341 = por %p339, %p340
      %p342 = scmp.ne.s32.totalorder %s331, %s332
      %p343 = scmp.eq.s32.totalorder %s31, 0
      %p344 = por %p342, %p343
      %p345 = scmp.ne.s32.totalorder %s331, %s332
      %p346 = scmp.eq.s32.totalorder %s32, 1
      %p347 = por %p345, %p346
      %p349 = scmp.ne.s32.totalorder %s332, %s348
      %p350 = scmp.eq.s32.totalorder %s32, 0
      %p351 = por %p349, %p350
      %s352 = ssub.s32 %s26, %s33
      %p353 = scmp.eq.s32.totalorder %s352, 0
      %s355 = sadd.s32 %s354, 1
      %s356 = scalar_select %p353, %s354, %s355
      %p359 = pneg %p353
      %p360 = scmp.eq.s32.totalorder %s26, 1
      %p361 = por %p359, %p360
      %p362 = scmp.ne.s32.totalorder %s354, %s357
      %p363 = scmp.eq.s32.totalorder %s26, 0
      %p364 = por %p362, %p363
      %p365 = scmp.ne.s32.totalorder %s354, %s357
      %p366 = scmp.eq.s32.totalorder %s31, 1
      %p367 = por %p365, %p366
      %p368 = scmp.ne.s32.totalorder %s357, %s358
      %p369 = scmp.eq.s32.totalorder %s31, 0
      %p370 = por %p368, %p369
      %p371 = scmp.ne.s32.totalorder %s357, %s358
      %p372 = scmp.eq.s32.totalorder %s32, 1
      %p373 = por %p371, %p372
      %p375 = scmp.ne.s32.totalorder %s358, %s374
      %p376 = scmp.eq.s32.totalorder %s32, 0
      %p377 = por %p375, %p376
      %s378 = ssub.s32 %s26, %s33
      %p379 = scmp.eq.s32.totalorder %s378, 0
      %s381 = sadd.s32 %s380, 1
      %s382 = scalar_select %p379, %s380, %s381
      %p385 = pneg %p379
      %p386 = scmp.eq.s32.totalorder %s26, 1
      %p387 = por %p385, %p386
      %p388 = scmp.ne.s32.totalorder %s380, %s383
      %p389 = scmp.eq.s32.totalorder %s26, 0
      %p390 = por %p388, %p389
      %p391 = scmp.ne.s32.totalorder %s380, %s383
      %p392 = scmp.eq.s32.totalorder %s31, 1
      %p393 = por %p391, %p392
      %p394 = scmp.ne.s32.totalorder %s383, %s384
      %p395 = scmp.eq.s32.totalorder %s31, 0
      %p396 = por %p394, %p395
      %p397 = scmp.ne.s32.totalorder %s383, %s384
      %p398 = scmp.eq.s32.totalorder %s32, 1
      %p399 = por %p397, %p398
      %p401 = scmp.ne.s32.totalorder %s384, %s400
      %p402 = scmp.eq.s32.totalorder %s32, 0
      %p403 = por %p401, %p402
      %s404 = ssub.s32 %s26, %s33
      %p405 = scmp.eq.s32.totalorder %s404, 0
      %s407 = sadd.s32 %s406, 1
      %s408 = scalar_select %p405, %s406, %s407
      %p411 = pneg %p405
      %p412 = scmp.eq.s32.totalorder %s26, 1
      %p413 = por %p411, %p412
      %p414 = scmp.ne.s32.totalorder %s406, %s409
      %p415 = scmp.eq.s32.totalorder %s26, 0
      %p416 = por %p414, %p415
      %p417 = scmp.ne.s32.totalorder %s406, %s409
      %p418 = scmp.eq.s32.totalorder %s31, 1
      %p419 = por %p417, %p418
      %p420 = scmp.ne.s32.totalorder %s409, %s410
      %p421 = scmp.eq.s32.totalorder %s31, 0
      %p422 = por %p420, %p421
      %p423 = scmp.ne.s32.totalorder %s409, %s410
      %p424 = scmp.eq.s32.totalorder %s32, 1
      %p425 = por %p423, %p424
      %p427 = scmp.ne.s32.totalorder %s410, %s426
      %p428 = scmp.eq.s32.totalorder %s32, 0
      %p429 = por %p427, %p428
      %s431 = sadd.s32 %s430, 1
      %p434 = scmp.eq.s32.totalorder %s26, 1
      %p435 = scmp.ne.s32.totalorder %s430, %s432
      %p436 = scmp.eq.s32.totalorder %s26, 0
      %p437 = por %p435, %p436
      %p438 = scmp.ne.s32.totalorder %s430, %s432
      %p439 = scmp.eq.s32.totalorder %s31, 1
      %p440 = por %p438, %p439
      %p441 = scmp.ne.s32.totalorder %s432, %s433
      %p442 = scmp.eq.s32.totalorder %s31, 0
      %p443 = por %p441, %p442
      %p444 = scmp.ne.s32.totalorder %s432, %s433
      %p445 = scmp.eq.s32.totalorder %s32, 1
      %p446 = por %p444, %p445
      %p448 = scmp.ne.s32.totalorder %s433, %s447
      %p449 = scmp.eq.s32.totalorder %s32, 0
      %p450 = por %p448, %p449
      %s452 = sadd.s32 %s451, 1
      %p455 = scmp.eq.s32.totalorder %s26, 1
      %p456 = scmp.ne.s32.totalorder %s451, %s453
      %p457 = scmp.eq.s32.totalorder %s26, 0
      %p458 = por %p456, %p457
      %p459 = scmp.ne.s32.totalorder %s451, %s453
      %p460 = scmp.eq.s32.totalorder %s31, 1
      %p461 = por %p459, %p460
      %p462 = scmp.ne.s32.totalorder %s453, %s454
      %p463 = scmp.eq.s32.totalorder %s31, 0
      %p464 = por %p462, %p463
      %p465 = scmp.ne.s32.totalorder %s453, %s454
      %p466 = scmp.eq.s32.totalorder %s32, 1
      %p467 = por %p465, %p466
      %p469 = scmp.ne.s32.totalorder %s454, %s468
      %p470 = scmp.eq.s32.totalorder %s32, 0
      %p471 = por %p469, %p470
      %s473 = sadd.s32 %s472, 1
      %p476 = scmp.eq.s32.totalorder %s26, 1
      %p477 = scmp.ne.s32.totalorder %s472, %s474
      %p478 = scmp.eq.s32.totalorder %s26, 0
      %p479 = por %p477, %p478
      %p480 = scmp.ne.s32.totalorder %s472, %s474
      %p481 = scmp.eq.s32.totalorder %s31, 1
      %p482 = por %p480, %p481
      %p483 = scmp.ne.s32.totalorder %s474, %s475
      %p484 = scmp.eq.s32.totalorder %s31, 0
      %p485 = por %p483, %p484
      %p486 = scmp.ne.s32.totalorder %s474, %s475
      %p487 = scmp.eq.s32.totalorder %s32, 1
      %p488 = por %p486, %p487
      %p490 = scmp.ne.s32.totalorder %s475, %s489
      %p491 = scmp.eq.s32.totalorder %s32, 0
      %p492 = por %p490, %p491
      %p493 = scmp.le.s32.totalorder 1, %s26
      %p494 = scmp.lt.s32.totalorder %s26, 3
      %p495 = pnand %p493, %p494
      %p496 = pneg %p495
      // Predicated region
      $region9: #{tpu_custom_call.1} parent=5 // pred_check
        _
      $region10: #{tpu_custom_call.1} parent=5 // pred_check_branch
        %498 = sbr.rel (%p495) target = $region12
      $region11: #{tpu_custom_call.1} parent=5 // pred_region
        %s499 = ssub.s32 %s26, 1
        // Predicated region
        $region13: #{tpu_custom_call.1} parent=11 // pred_check
          %p500 = pneg %p47
        $region14: #{tpu_custom_call.1} parent=11 // pred_check_branch
          %502 = sbr.rel (%p500) target = $region16
        $region15: #{tpu_custom_call.1} parent=11 // pred_region
          %504 = vsyncadd [#allocation4], 0
          %s505 = sshll.u32 %s0, 4
          %s506 = int_to_ptr.hbm [resolvable:$true] %s505
          %s507 = sshll.u32 [#allocation3], 4
          %s508 = int_to_ptr.vmem [resolvable:$true] %s507
          %513 = dma.hbm_to_vmem [thread:$0]  %s506, 256, %s508, [#allocation4], 128, 128, 8
        $region16: #{tpu_custom_call.1} parent=11 // pred_fallthru
          _
        // Predicated region
        $region17: #{tpu_custom_call.1} parent=11 // pred_check
          %p514 = pneg %p68
        $region18: #{tpu_custom_call.1} parent=11 // pred_check_branch
          %516 = sbr.rel (%p514) target = $region20
        $region19: #{tpu_custom_call.1} parent=11 // pred_region
          _
        $region20: #{tpu_custom_call.1} parent=11 // pred_fallthru
          _
        // Predicated region
        $region21: #{tpu_custom_call.1} parent=11 // pred_check
          %p517 = pneg %p89
        $region22: #{tpu_custom_call.1} parent=11 // pred_check_branch
          %519 = sbr.rel (%p517) target = $region24
        $region23: #{tpu_custom_call.1} parent=11 // pred_region
          _
        $region24: #{tpu_custom_call.1} parent=11 // pred_fallthru
          _
        // Predicated region
        $region25: #{tpu_custom_call.1} parent=11 // pred_check
          %p520 = pneg %p110
        $region26: #{tpu_custom_call.1} parent=11 // pred_check_branch
          %522 = sbr.rel (%p520) target = $region28
        $region27: #{tpu_custom_call.1} parent=11 // pred_region
          %524 = vsyncadd [#allocation6], 0
          %s526 = sshll.u32 %s3, 4
          %s527 = int_to_ptr.hbm [resolvable:$true] %s526
          %s528 = sshll.u32 [#allocation5], 4
          %s529 = int_to_ptr.vmem [resolvable:$true] %s528
          %531 = dma.hbm_to_vmem [thread:$0]  %s527, 16, %s529, [#allocation6]
        $region28: #{tpu_custom_call.1} parent=11 // pred_fallthru
          _
        // Predicated region
        $region29: #{tpu_custom_call.1} parent=11 // pred_check
          %p532 = pneg %p443
        $region30: #{tpu_custom_call.1} parent=11 // pred_check_branch
          %534 = sbr.rel (%p532) target = $region32
        $region31: #{tpu_custom_call.1} parent=11 // pred_region
          _
        $region32: #{tpu_custom_call.1} parent=11 // pred_fallthru
          _
        // Predicated region
        $region33: #{tpu_custom_call.1} parent=11 // pred_check
          %p535 = pneg %p464
        $region34: #{tpu_custom_call.1} parent=11 // pred_check_branch
          %537 = sbr.rel (%p535) target = $region36
        $region35: #{tpu_custom_call.1} parent=11 // pred_region
          %539 = vsyncadd [#allocation6], 0
          %s541 = sshll.u32 %s17, 4
          %s542 = int_to_ptr.hbm [resolvable:$true] %s541
          %s543 = sshll.u32 [#allocation15], 4
          %s544 = int_to_ptr.vmem [resolvable:$true] %s543
          %546 = dma.hbm_to_vmem [thread:$0]  %s542, 16, %s544, [#allocation6]
        $region36: #{tpu_custom_call.1} parent=11 // pred_fallthru
          _
      $region12: #{tpu_custom_call.1} parent=5 // pred_fallthru
        _
      %p547 = scmp.lt.s32.totalorder %s26, 2
      // Predicated region
      $region37: #{tpu_custom_call.1} parent=5 // pred_check
        %p548 = pneg %p547
      $region38: #{tpu_custom_call.1} parent=5 // pred_check_branch
        %550 = sbr.rel (%p548) target = $region40
      $region39: #{tpu_custom_call.1} parent=5 // pred_region
        // Predicated region
        $region41: #{tpu_custom_call.1} parent=39 // pred_check
          %p551 = pneg %p130
        $region42: #{tpu_custom_call.1} parent=39 // pred_check_branch
          %553 = sbr.rel (%p551) target = $region44
        $region43: #{tpu_custom_call.1} parent=39 // pred_region
          %s554 = sand.u32 %s26, 1
          %s555 = scalar_lea.sflag [#allocation4], %s554
          %s556 = sand.u32 %s120, 1
          %s557 = smul.addr %s556, 16
          %s558 = scalar_lea.vmem [#allocation7], %s557
          %560 = vsyncadd %s555, 0
          %s561 = smul.addr %s26, 4
          %s562 = smul.addr %s561, 4
          %s563 = scalar_lea.hbm %s4, %s562
          %s564 = sshll.u32 %s563, 4
          %s565 = int_to_ptr.hbm [resolvable:$true] %s564
          %s566 = sshll.u32 %s558, 4
          %s567 = int_to_ptr.vmem [resolvable:$true] %s566
          %572 = dma.hbm_to_vmem [thread:$0]  %s565, 256, %s567, %s555, 64, 64, 4
        $region44: #{tpu_custom_call.1} parent=39 // pred_fallthru
          _
        // Predicated region
        $region45: #{tpu_custom_call.1} parent=39 // pred_check
          %p573 = pneg %p156
        $region46: #{tpu_custom_call.1} parent=39 // pred_check_branch
          %575 = sbr.rel (%p573) target = $region48
        $region47: #{tpu_custom_call.1} parent=39 // pred_region
          %p576 = scmp.lt.s32.totalorder %s26, 1
          %s577 = scalar_select %p576, %s26, 1
          %s578 = scalar_lea.vmem %s5, %s577
        $region48: #{tpu_custom_call.1} parent=39 // pred_fallthru
          _
        // Predicated region
        $region49: #{tpu_custom_call.1} parent=39 // pred_check
          %p579 = pneg %p182
        $region50: #{tpu_custom_call.1} parent=39 // pred_check_branch
          %581 = sbr.rel (%p579) target = $region52
        $region51: #{tpu_custom_call.1} parent=39 // pred_region
          %s582 = sand.u32 %s26, 1
          %s583 = scalar_lea.sflag [#allocation4], %s582
          %s584 = sand.u32 %s172, 1
          %s585 = smul.addr %s584, 16
          %s586 = scalar_lea.vmem [#allocation8], %s585
          %588 = vsyncadd %s583, 0
          %s589 = smul.addr %s26, 4
          %s590 = smul.addr %s589, 4
          %s591 = scalar_lea.hbm %s6, %s590
          %s592 = sshll.u32 %s591, 4
          %s593 = int_to_ptr.hbm [resolvable:$true] %s592
          %s594 = sshll.u32 %s586, 4
          %s595 = int_to_ptr.vmem [resolvable:$true] %s594
          %600 = dma.hbm_to_vmem [thread:$0]  %s593, 256, %s595, %s583, 64, 64, 4
        $region52: #{tpu_custom_call.1} parent=39 // pred_fallthru
          _
        // Predicated region
        $region53: #{tpu_custom_call.1} parent=39 // pred_check
          %p601 = pneg %p208
        $region54: #{tpu_custom_call.1} parent=39 // pred_check_branch
          %603 = sbr.rel (%p601) target = $region56
        $region55: #{tpu_custom_call.1} parent=39 // pred_region
          %p604 = scmp.lt.s32.totalorder %s26, 1
          %s605 = scalar_select %p604, %s26, 1
          %s606 = scalar_lea.vmem %s7, %s605
        $region56: #{tpu_custom_call.1} parent=39 // pred_fallthru
          _
        // Predicated region
        $region57: #{tpu_custom_call.1} parent=39 // pred_check
          %p607 = pneg %p234
        $region58: #{tpu_custom_call.1} parent=39 // pred_check_branch
          %609 = sbr.rel (%p607) target = $region60
        $region59: #{tpu_custom_call.1} parent=39 // pred_region
          %p610 = scmp.lt.s32.totalorder %s26, 1
          %s611 = scalar_select %p610, %s26, 1
          %s612 = scalar_lea.vmem %s8, %s611
        $region60: #{tpu_custom_call.1} parent=39 // pred_fallthru
          _
        // Predicated region
        $region61: #{tpu_custom_call.1} parent=39 // pred_check
          %p613 = pneg %p260
        $region62: #{tpu_custom_call.1} parent=39 // pred_check_branch
          %615 = sbr.rel (%p613) target = $region64
        $region63: #{tpu_custom_call.1} parent=39 // pred_region
          %s616 = sand.u32 %s26, 1
          %s617 = scalar_lea.sflag [#allocation4], %s616
          %s618 = sand.u32 %s250, 1
          %s619 = scalar_lea.vmem [#allocation9], %s618
          %621 = vsyncadd %s617, 0
          %s622 = scalar_lea.hbm %s9, %s26
          %s624 = sshll.u32 %s622, 4
          %s625 = int_to_ptr.hbm [resolvable:$true] %s624
          %s626 = sshll.u32 %s619, 4
          %s627 = int_to_ptr.vmem [resolvable:$true] %s626
          %629 = dma.hbm_to_vmem [thread:$0]  %s625, 16, %s627, %s617
        $region64: #{tpu_custom_call.1} parent=39 // pred_fallthru
          _
        // Predicated region
        $region65: #{tpu_custom_call.1} parent=39 // pred_check
          %p630 = pneg %p286
        $region66: #{tpu_custom_call.1} parent=39 // pred_check_branch
          %632 = sbr.rel (%p630) target = $region68
        $region67: #{tpu_custom_call.1} parent=39 // pred_region
          %s633 = sand.u32 %s26, 1
          %s634 = scalar_lea.sflag [#allocation4], %s633
          %s635 = sand.u32 %s276, 1
          %s636 = smul.addr %s635, 16
          %s637 = scalar_lea.vmem [#allocation10], %s636
          %639 = vsyncadd %s634, 0
          %s640 = smul.addr %s26, 4
          %s641 = smul.addr %s640, 4
          %s642 = scalar_lea.hbm %s10, %s641
          %s643 = sshll.u32 %s642, 4
          %s644 = int_to_ptr.hbm [resolvable:$true] %s643
          %s645 = sshll.u32 %s637, 4
          %s646 = int_to_ptr.vmem [resolvable:$true] %s645
          %651 = dma.hbm_to_vmem [thread:$0]  %s644, 256, %s646, %s634, 64, 64, 4
        $region68: #{tpu_custom_call.1} parent=39 // pred_fallthru
          _
        // Predicated region
        $region69: #{tpu_custom_call.1} parent=39 // pred_check
          %p652 = pneg %p312
        $region70: #{tpu_custom_call.1} parent=39 // pred_check_branch
          %654 = sbr.rel (%p652) target = $region72
        $region71: #{tpu_custom_call.1} parent=39 // pred_region
          %s655 = sand.u32 %s26, 1
          %s656 = scalar_lea.sflag [#allocation4], %s655
          %s657 = sand.u32 %s302, 1
          %s658 = scalar_lea.vmem [#allocation11], %s657
          %660 = vsyncadd %s656, 0
          %s661 = scalar_lea.hbm %s11, %s26
          %s663 = sshll.u32 %s661, 4
          %s664 = int_to_ptr.hbm [resolvable:$true] %s663
          %s665 = sshll.u32 %s658, 4
          %s666 = int_to_ptr.vmem [resolvable:$true] %s665
          %668 = dma.hbm_to_vmem [thread:$0]  %s664, 16, %s666, %s656
        $region72: #{tpu_custom_call.1} parent=39 // pred_fallthru
          _
        // Predicated region
        $region73: #{tpu_custom_call.1} parent=39 // pred_check
          %p669 = pneg %p338
        $region74: #{tpu_custom_call.1} parent=39 // pred_check_branch
          %671 = sbr.rel (%p669) target = $region76
        $region75: #{tpu_custom_call.1} parent=39 // pred_region
          %p672 = scmp.lt.s32.totalorder %s26, 1
          %s673 = scalar_select %p672, %s26, 1
          %s674 = smul.addr %s673, 8
          %s675 = smul.addr %s674, 4
          %s676 = scalar_lea.vmem %s12, %s675
        $region76: #{tpu_custom_call.1} parent=39 // pred_fallthru
          _
        // Predicated region
        $region77: #{tpu_custom_call.1} parent=39 // pred_check
          %p677 = pneg %p364
        $region78: #{tpu_custom_call.1} parent=39 // pred_check_branch
          %679 = sbr.rel (%p677) target = $region80
        $region79: #{tpu_custom_call.1} parent=39 // pred_region
          %s680 = sand.u32 %s26, 1
          %s681 = scalar_lea.sflag [#allocation4], %s680
          %s682 = sand.u32 %s354, 1
          %s683 = scalar_lea.vmem [#allocation12], %s682
          %685 = vsyncadd %s681, 0
          %s686 = scalar_lea.hbm %s13, %s26
          %s688 = sshll.u32 %s686, 4
          %s689 = int_to_ptr.hbm [resolvable:$true] %s688
          %s690 = sshll.u32 %s683, 4
          %s691 = int_to_ptr.vmem [resolvable:$true] %s690
          %693 = dma.hbm_to_vmem [thread:$0]  %s689, 16, %s691, %s681
        $region80: #{tpu_custom_call.1} parent=39 // pred_fallthru
          _
        // Predicated region
        $region81: #{tpu_custom_call.1} parent=39 // pred_check
          %p694 = pneg %p390
        $region82: #{tpu_custom_call.1} parent=39 // pred_check_branch
          %696 = sbr.rel (%p694) target = $region84
        $region83: #{tpu_custom_call.1} parent=39 // pred_region
          %s697 = sand.u32 %s26, 1
          %s698 = scalar_lea.sflag [#allocation4], %s697
          %s699 = sand.u32 %s380, 1
          %s700 = scalar_lea.vmem [#allocation13], %s699
          %702 = vsyncadd %s698, 0
          %s703 = scalar_lea.hbm %s14, %s26
          %s705 = sshll.u32 %s703, 4
          %s706 = int_to_ptr.hbm [resolvable:$true] %s705
          %s707 = sshll.u32 %s700, 4
          %s708 = int_to_ptr.vmem [resolvable:$true] %s707
          %710 = dma.hbm_to_vmem [thread:$0]  %s706, 16, %s708, %s698
        $region84: #{tpu_custom_call.1} parent=39 // pred_fallthru
          _
        // Predicated region
        $region85: #{tpu_custom_call.1} parent=39 // pred_check
          %p711 = pneg %p416
        $region86: #{tpu_custom_call.1} parent=39 // pred_check_branch
          %713 = sbr.rel (%p711) target = $region88
        $region87: #{tpu_custom_call.1} parent=39 // pred_region
          %s714 = sand.u32 %s26, 1
          %s715 = scalar_lea.sflag [#allocation4], %s714
          %s716 = sand.u32 %s406, 1
          %s717 = scalar_lea.vmem [#allocation14], %s716
          %719 = vsyncadd %s715, 0
          %s720 = scalar_lea.hbm %s15, %s26
          %s722 = sshll.u32 %s720, 4
          %s723 = int_to_ptr.hbm [resolvable:$true] %s722
          %s724 = sshll.u32 %s717, 4
          %s725 = int_to_ptr.vmem [resolvable:$true] %s724
          %727 = dma.hbm_to_vmem [thread:$0]  %s723, 16, %s725, %s715
        $region88: #{tpu_custom_call.1} parent=39 // pred_fallthru
          _
      $region40: #{tpu_custom_call.1} parent=5 // pred_fallthru
        _
      %p728 = scmp.le.s32.totalorder 1, %s26
      %p729 = scmp.lt.s32.totalorder %s26, 3
      %p730 = pnand %p728, %p729
      %p731 = pneg %p730
      // Predicated region
      $region89: #{tpu_custom_call.1} parent=5 // pred_check
        _
      $region90: #{tpu_custom_call.1} parent=5 // pred_check_branch
        %733 = sbr.rel (%p730) target = $region92
      $region91: #{tpu_custom_call.1} parent=5 // pred_region
        %s734 = ssub.s32 %s26, 1
        // Predicated region
        $region93: #{tpu_custom_call.1} parent=91 // pred_check
          %p735 = pneg %p47
        $region94: #{tpu_custom_call.1} parent=91 // pred_check_branch
          %737 = sbr.rel (%p735) target = $region96
        $region95: #{tpu_custom_call.1} parent=91 // pred_region
          %739 = dma.done [#allocation4], 256
        $region96: #{tpu_custom_call.1} parent=91 // pred_fallthru
          _
        // Predicated region
        $region97: #{tpu_custom_call.1} parent=91 // pred_check
          %p740 = pneg %p110
        $region98: #{tpu_custom_call.1} parent=91 // pred_check_branch
          %742 = sbr.rel (%p740) target = $region100
        $region99: #{tpu_custom_call.1} parent=91 // pred_region
          %744 = dma.done [#allocation6], 16
        $region100: #{tpu_custom_call.1} parent=91 // pred_fallthru
          _
        %s745 = sand.u32 %s31, 1
        %s746 = scalar_lea.sflag [#allocation4], %s745
        %s747 = sand.u32 %s123, 1
        %s748 = smul.addr %s747, 16
        %s749 = scalar_lea.vmem [#allocation7], %s748
        // Predicated region
        $region101: #{tpu_custom_call.1} parent=91 // pred_check
          %p750 = pneg %p136
        $region102: #{tpu_custom_call.1} parent=91 // pred_check_branch
          %752 = sbr.rel (%p750) target = $region104
        $region103: #{tpu_custom_call.1} parent=91 // pred_region
          %754 = dma.done %s746, 256
        $region104: #{tpu_custom_call.1} parent=91 // pred_fallthru
          _
        %s755 = sand.u32 %s31, 1
        %s756 = scalar_lea.sflag [#allocation4], %s755
        %s757 = sand.u32 %s175, 1
        %s758 = smul.addr %s757, 16
        %s759 = scalar_lea.vmem [#allocation8], %s758
        // Predicated region
        $region105: #{tpu_custom_call.1} parent=91 // pred_check
          %p760 = pneg %p188
        $region106: #{tpu_custom_call.1} parent=91 // pred_check_branch
          %762 = sbr.rel (%p760) target = $region108
        $region107: #{tpu_custom_call.1} parent=91 // pred_region
          %764 = dma.done %s756, 256
        $region108: #{tpu_custom_call.1} parent=91 // pred_fallthru
          _
        %s765 = sand.u32 %s31, 1
        %s766 = scalar_lea.sflag [#allocation4], %s765
        %s767 = sand.u32 %s253, 1
        %s768 = scalar_lea.vmem [#allocation9], %s767
        // Predicated region
        $region109: #{tpu_custom_call.1} parent=91 // pred_check
          %p769 = pneg %p266
        $region110: #{tpu_custom_call.1} parent=91 // pred_check_branch
          %771 = sbr.rel (%p769) target = $region112
        $region111: #{tpu_custom_call.1} parent=91 // pred_region
          %773 = dma.done %s766, 16
        $region112: #{tpu_custom_call.1} parent=91 // pred_fallthru
          _
        %s774 = sand.u32 %s31, 1
        %s775 = scalar_lea.sflag [#allocation4], %s774
        %s776 = sand.u32 %s279, 1
        %s777 = smul.addr %s776, 16
        %s778 = scalar_lea.vmem [#allocation10], %s777
        // Predicated region
        $region113: #{tpu_custom_call.1} parent=91 // pred_check
          %p779 = pneg %p292
        $region114: #{tpu_custom_call.1} parent=91 // pred_check_branch
          %781 = sbr.rel (%p779) target = $region116
        $region115: #{tpu_custom_call.1} parent=91 // pred_region
          %783 = dma.done %s775, 256
        $region116: #{tpu_custom_call.1} parent=91 // pred_fallthru
          _
        %s784 = sand.u32 %s31, 1
        %s785 = scalar_lea.sflag [#allocation4], %s784
        %s786 = sand.u32 %s305, 1
        %s787 = scalar_lea.vmem [#allocation11], %s786
        // Predicated region
        $region117: #{tpu_custom_call.1} parent=91 // pred_check
          %p788 = pneg %p318
        $region118: #{tpu_custom_call.1} parent=91 // pred_check_branch
          %790 = sbr.rel (%p788) target = $region120
        $region119: #{tpu_custom_call.1} parent=91 // pred_region
          %792 = dma.done %s785, 16
        $region120: #{tpu_custom_call.1} parent=91 // pred_fallthru
          _
        %s793 = sand.u32 %s31, 1
        %s794 = scalar_lea.sflag [#allocation4], %s793
        %s795 = sand.u32 %s357, 1
        %s796 = scalar_lea.vmem [#allocation12], %s795
        // Predicated region
        $region121: #{tpu_custom_call.1} parent=91 // pred_check
          %p797 = pneg %p370
        $region122: #{tpu_custom_call.1} parent=91 // pred_check_branch
          %799 = sbr.rel (%p797) target = $region124
        $region123: #{tpu_custom_call.1} parent=91 // pred_region
          %801 = dma.done %s794, 16
        $region124: #{tpu_custom_call.1} parent=91 // pred_fallthru
          _
        %s802 = sand.u32 %s31, 1
        %s803 = scalar_lea.sflag [#allocation4], %s802
        %s804 = sand.u32 %s383, 1
        %s805 = scalar_lea.vmem [#allocation13], %s804
        // Predicated region
        $region125: #{tpu_custom_call.1} parent=91 // pred_check
          %p806 = pneg %p396
        $region126: #{tpu_custom_call.1} parent=91 // pred_check_branch
          %808 = sbr.rel (%p806) target = $region128
        $region127: #{tpu_custom_call.1} parent=91 // pred_region
          %810 = dma.done %s803, 16
        $region128: #{tpu_custom_call.1} parent=91 // pred_fallthru
          _
        %s811 = sand.u32 %s31, 1
        %s812 = scalar_lea.sflag [#allocation4], %s811
        %s813 = sand.u32 %s409, 1
        %s814 = scalar_lea.vmem [#allocation14], %s813
        // Predicated region
        $region129: #{tpu_custom_call.1} parent=91 // pred_check
          %p815 = pneg %p422
        $region130: #{tpu_custom_call.1} parent=91 // pred_check_branch
          %817 = sbr.rel (%p815) target = $region132
        $region131: #{tpu_custom_call.1} parent=91 // pred_region
          %819 = dma.done %s812, 16
        $region132: #{tpu_custom_call.1} parent=91 // pred_fallthru
          _
        // Predicated region
        $region133: #{tpu_custom_call.1} parent=91 // pred_check
          %p820 = pneg %p464
        $region134: #{tpu_custom_call.1} parent=91 // pred_check_branch
          %822 = sbr.rel (%p820) target = $region136
        $region135: #{tpu_custom_call.1} parent=91 // pred_region
          %824 = dma.done [#allocation6], 16
        $region136: #{tpu_custom_call.1} parent=91 // pred_fallthru
          _
        %p825 = pneg %p47
        %p826 = pneg %p44
        %p827 = pneg %p68
        %p828 = pneg %p65
        %p829 = pneg %p89
        %p830 = pneg %p86
        %p831 = pneg %p110
        %p832 = pneg %p107
        %s833 = sand.u32 %s31, 1
        %s834 = scalar_lea.sflag [#allocation4], %s833
        %s835 = sand.u32 %s123, 1
        %s836 = smul.addr %s835, 16
        %s837 = scalar_lea.vmem [#allocation7], %s836
        %p838 = pneg %p136
        %p839 = pneg %p133
        %p840 = scmp.lt.s32.totalorder %s31, 1
        %s841 = scalar_select %p840, %s31, 1
        %s842 = scalar_lea.vmem %s5, %s841
        %p843 = pneg %p162
        %p844 = pneg %p159
        %s845 = sand.u32 %s31, 1
        %s846 = scalar_lea.sflag [#allocation4], %s845
        %s847 = sand.u32 %s175, 1
        %s848 = smul.addr %s847, 16
        %s849 = scalar_lea.vmem [#allocation8], %s848
        %p850 = pneg %p188
        %p851 = pneg %p185
        %p852 = scmp.lt.s32.totalorder %s31, 1
        %s853 = scalar_select %p852, %s31, 1
        %s854 = scalar_lea.vmem %s7, %s853
        %p855 = pneg %p214
        %p856 = pneg %p211
        %p857 = scmp.lt.s32.totalorder %s31, 1
        %s858 = scalar_select %p857, %s31, 1
        %s859 = scalar_lea.vmem %s8, %s858
        %p860 = pneg %p240
        %p861 = pneg %p237
        %s862 = sand.u32 %s31, 1
        %s863 = scalar_lea.sflag [#allocation4], %s862
        %s864 = sand.u32 %s253, 1
        %s865 = scalar_lea.vmem [#allocation9], %s864
        %p866 = pneg %p266
        %p867 = pneg %p263
        %s868 = sand.u32 %s31, 1
        %s869 = scalar_lea.sflag [#allocation4], %s868
        %s870 = sand.u32 %s279, 1
        %s871 = smul.addr %s870, 16
        %s872 = scalar_lea.vmem [#allocation10], %s871
        %p873 = pneg %p292
        %p874 = pneg %p289
        %s875 = sand.u32 %s31, 1
        %s876 = scalar_lea.sflag [#allocation4], %s875
        %s877 = sand.u32 %s305, 1
        %s878 = scalar_lea.vmem [#allocation11], %s877
        %p879 = pneg %p318
        %p880 = pneg %p315
        %p881 = scmp.lt.s32.totalorder %s31, 1
        %s882 = scalar_select %p881, %s31, 1
        %s883 = smul.addr %s882, 8
        %s884 = smul.addr %s883, 4
        %s885 = scalar_lea.vmem %s12, %s884
        %p886 = pneg %p344
        %p887 = pneg %p341
        %s888 = sand.u32 %s31, 1
        %s889 = scalar_lea.sflag [#allocation4], %s888
        %s890 = sand.u32 %s357, 1
        %s891 = scalar_lea.vmem [#allocation12], %s890
        %p892 = pneg %p370
        %p893 = pneg %p367
        %s894 = sand.u32 %s31, 1
        %s895 = scalar_lea.sflag [#allocation4], %s894
        %s896 = sand.u32 %s383, 1
        %s897 = scalar_lea.vmem [#allocation13], %s896
        %p898 = pneg %p396
        %p899 = pneg %p393
        %s900 = sand.u32 %s31, 1
        %s901 = scalar_lea.sflag [#allocation4], %s900
        %s902 = sand.u32 %s409, 1
        %s903 = scalar_lea.vmem [#allocation14], %s902
        %p904 = pneg %p422
        %p905 = pneg %p419
        %p906 = pneg %p443
        %p907 = pneg %p440
        %p908 = pneg %p464
        %p909 = pneg %p461
        %p910 = pneg %p485
        %p911 = pneg %p482
        %p912 = scmp.lt.s32.totalorder %s31, 1
        %s913 = scalar_select %p912, %s31, 1
        %s914 = scalar_lea.vmem %s5, %s913
        %p915 = scmp.lt.s32.totalorder %s31, 1
        %s916 = scalar_select %p915, %s31, 1
        %s917 = scalar_lea.vmem %s7, %s916
        %p918 = scmp.lt.s32.totalorder %s31, 1
        %s919 = scalar_select %p918, %s31, 1
        %s920 = scalar_lea.vmem %s8, %s919
        %p921 = scmp.lt.s32.totalorder %s31, 1
        %s922 = scalar_select %p921, %s31, 1
        %s923 = smul.addr %s922, 8
        %s924 = smul.addr %s923, 4
        %s925 = scalar_lea.vmem %s12, %s924
        %p927 = scmp.eq.s32.totalorder %s31, 0
        // Predicated region
        $region137: #{tpu_custom_call.1} parent=91 // pred_check
          %p928 = pneg %p927
        $region138: #{tpu_custom_call.1} parent=91 // pred_check_branch
          %930 = sbr.rel (%p928) target = $region140
        $region139: #{tpu_custom_call.1} parent=91 // pred_region
          %v931 = vld [vmem:[#allocation3] sm:$0xff]
          %v932 = vld [vmem:[#allocation3 + $0x8] sm:$0xff]
          %v933 = vld [vmem:[%s2] sm:$0x1]
          %v934 = vld [vmem:[#allocation5] sm:$0x1]
          %vm935 = vcmask 261120
          %v936 = vsel %vm935, %v931, 0.0
          %937 = vadd.xlane.f32.xlu0 %v936
          %v938 = vpop.xlane.xlu0 %937
          %v939 = vsel %vm935, %v932, 0.0
          %940 = vadd.xlane.f32.xlu0 %v939
          %v941 = vpop.xlane.xlu0 %940
          %v942 = vrcp.pop 32.0
          %v943 = vmul.f32 32.0, %v942
          %v944 = vsub.f32 1.0, %v943
          %v945 = vmul.f32 %v942, %v944
          %v946 = vadd.f32 %v942, %v945
          %vm947 = vweird.f32 %v942
          %v948 = vsel %vm947, %v942, %v946
          %v949 = vmul.f32 %v938, %v948
          %v950 = vmul.f32 %v941, %v948
          %v951 = vsub.f32 %v931, %v949
          %v952 = vsub.f32 %v932, %v950
          %v953 = vmul.f32 %v951, %v951
          %v954 = vmul.f32 %v952, %v952
          %v955 = vsel %vm935, %v953, 0.0
          %956 = vadd.xlane.f32.xlu0 %v955
          %v957 = vpop.xlane.xlu0 %956
          %v958 = vsel %vm935, %v954, 0.0
          %959 = vadd.xlane.f32.xlu0 %v958
          %v960 = vpop.xlane.xlu0 %959
          %v961 = vmul.f32 %v957, %v948
          %v962 = vmul.f32 %v960, %v948
          %v963 = vadd.f32 %v961, 1e-12
          %v964 = vadd.f32 %v962, 1e-12
          %v965 = vrsqrt.pop %v963
          %v966 = vmul.f32 %v965, %v963
          %v967 = vmul.f32 %v966, %v965
          %v968 = vmul.f32 0.5, %v967
          %v969 = vsub.f32 1.5, %v968
          %v970 = vmul.f32 %v965, %v969
          %vm971 = vweird.f32 %v963
          %vm972 = vweird.f32 %v965
          %vm973 = vmor %vm971, %vm972
          %v974 = vsel %vm973, %v965, %v970
          %v975 = vrsqrt.pop %v964
          %v976 = vmul.f32 %v975, %v964
          %v977 = vmul.f32 %v976, %v975
          %v978 = vmul.f32 0.5, %v977
          %v979 = vsub.f32 1.5, %v978
          %v980 = vmul.f32 %v975, %v979
          %vm981 = vweird.f32 %v964
          %vm982 = vweird.f32 %v975
          %vm983 = vmor %vm981, %vm982
          %v984 = vsel %vm983, %v975, %v980
          %v985 = vmul.f32 %v951, %v974
          %v986 = vmul.f32 %v952, %v984
          %v988 = vperm.slane %v933, 0
          %v990 = vmul.f32 %v985, %v988
          %v991 = vmul.f32 %v986, %v988
          %v993 = vperm.slane %v934, 0
          %v995 = vadd.f32 %v990, %v993
          %v996 = vadd.f32 %v991, %v993
          %997 = vst.msk [vmem:[#allocation2] sm:$0xff] %vm935, %v995
          %998 = vst.msk [vmem:[#allocation2 + $0x8] sm:$0xff] %vm935, %v996
        $region140: #{tpu_custom_call.1} parent=91 // pred_fallthru
          _
        %v999 = vld [vmem:[#allocation2] sm:$0xff]
        %v1000 = vld [vmem:[#allocation2 + $0x8] sm:$0xff]
        %v1001 = vpack.c.bf16 %v1000, %v999
        %v1002 = vld [vmem:[%s749] sm:$0xf]
        %v1003 = vld [vmem:[%s749 + $0x4] sm:$0xf]
        %v1004 = vld [vmem:[%s749 + $0x8] sm:$0xf]
        %v1005 = vld [vmem:[%s749 + $0xc] sm:$0xf]
        %v1006 = vld [vmem:[%s914] sm:$0x1]
        %v1008 = vperm.slane %v1006, 0
        %v1014 = vunpack.c.l.b16 %v1002
        %v1015 = vunpack.c.l.b16 %v1003
        %v1016 = vunpack.c.l.b16 %v1004
        %v1017 = vunpack.c.l.b16 %v1005
        %v1018 = vpack.c.b16 %v1015, %v1014
        %v1019 = vpack.c.b16 %v1017, %v1016
        %vm1022 = vcmask 261120
        %v1024 = vsel %vm1022, %v1001, 0
        %1026 = vmatpush.bf16.msra.mxu0 0
        %1027 = vmatpush.bf16.msra.mxu0 0
        %1028 = vmatpush.bf16.msra.mxu0 0
        %1029 = vmatpush.bf16.msra.mxu0 0
        %1030 = vmatpush.bf16.msra.mxu0 0
        %1031 = vmatpush.bf16.msra.mxu0 0
        %1032 = vmatpush.bf16.msra.mxu0 %v1019
        %1033 = vmatpush.bf16.msra.mxu0 %v1018
        %1034 = vmatmul.bf16.gmra.mxu0 %v1024
        %v1035 = vpop.f32.mrf.mxu0
        %v1036 = vadd.f32 %v1008, %v1035
        %v1037 = vpop.f32.mrf.mxu0
        %v1038 = vadd.f32 %v1008, %v1037
        %1039 = vdwg.mxu0
        %1041 = vrot.lane.b32.xlu0 %v1036, 120
        %v1042 = vpop.permute.xlu0 %1041
        %1044 = vrot.lane.b32.xlu0 %v1036, 112
        %v1045 = vpop.permute.xlu0 %1044
        %1047 = vrot.lane.b32.xlu0 %v1036, 104
        %v1048 = vpop.permute.xlu0 %1047
        %1051 = vrot.lane.b32.xlu0 %v1038, 120
        %v1052 = vpop.permute.xlu0 %1051
        %1054 = vrot.lane.b32.xlu0 %v1038, 112
        %v1055 = vpop.permute.xlu0 %1054
        %1057 = vrot.lane.b32.xlu0 %v1038, 104
        %v1058 = vpop.permute.xlu0 %1057
        %v1060 = vpack.c.bf16 %v1036, %v1036
        %v1061 = vpack.c.bf16 %v1042, %v1042
        %v1062 = vpack.c.bf16 %v1045, %v1045
        %v1063 = vpack.c.bf16 %v1048, %v1048
        %v1064 = vpack.c.bf16 %v1038, %v1038
        %v1065 = vpack.c.bf16 %v1052, %v1052
        %v1066 = vpack.c.bf16 %v1055, %v1055
        %v1067 = vpack.c.bf16 %v1058, %v1058
        %v1069 = vunpack.c.l.b16 %v1060
        %v1070 = vpack.c.b16 %v1069, %v1069
        %1071 = vrot.lane.b32.xlu0 %v1070, 96
        %v1072 = vpop.permute.xlu0 %1071
        %vm1073 = vcmask 64512
        %v1075 = vsel %vm1073, %v1060, 0
        %v1078 = vsel %vm1073, %v1072, 0
        %1080 = vmatpush.bf16.xpose.msra.mxu0 0
        %1081 = vmatpush.bf16.xpose.msra.mxu0 0
        %1082 = vmatpush.bf16.xpose.msra.mxu0 0
        %1083 = vmatpush.bf16.xpose.msra.mxu0 0
        %1084 = vmatpush.bf16.xpose.msra.mxu0 0
        %1085 = vmatpush.bf16.xpose.msra.mxu0 0
        %1086 = vmatpush.bf16.xpose.msra.mxu0 0
        %1087 = vmatpush.bf16.xpose.msra.mxu0 %v1078
        %1088 = vmatmul.bf16.gmra.mxu0 %v1075
        %v1089 = vpop.f32.mrf.mxu0
        %v1090 = vadd.f32 0.0, %v1089
        %v1091 = vpop.f32.mrf.mxu0
        %1092 = vdwg.mxu0
        %v1094 = vunpack.c.l.b16 %v1061
        %v1095 = vpack.c.b16 %v1094, %v1094
        %1096 = vrot.lane.b32.xlu0 %v1095, 96
        %v1097 = vpop.permute.xlu0 %1096
        %v1099 = vsel %vm1073, %v1061, 0
        %v1102 = vsel %vm1073, %v1097, 0
        %1104 = vmatpush.bf16.xpose.msra.mxu0 0
        %1105 = vmatpush.bf16.xpose.msra.mxu0 0
        %1106 = vmatpush.bf16.xpose.msra.mxu0 0
        %1107 = vmatpush.bf16.xpose.msra.mxu0 0
        %1108 = vmatpush.bf16.xpose.msra.mxu0 0
        %1109 = vmatpush.bf16.xpose.msra.mxu0 0
        %1110 = vmatpush.bf16.xpose.msra.mxu0 0
        %1111 = vmatpush.bf16.xpose.msra.mxu0 %v1102
        %1112 = vmatmul.bf16.gmra.mxu0 %v1099
        %v1113 = vpop.f32.mrf.mxu0
        %v1114 = vadd.f32 0.0, %v1113
        %v1115 = vpop.f32.mrf.mxu0
        %1116 = vdwg.mxu0
        %v1118 = vunpack.c.l.b16 %v1062
        %v1119 = vpack.c.b16 %v1118, %v1118
        %1120 = vrot.lane.b32.xlu0 %v1119, 96
        %v1121 = vpop.permute.xlu0 %1120
        %v1123 = vsel %vm1073, %v1062, 0
        %v1126 = vsel %vm1073, %v1121, 0
        %1128 = vmatpush.bf16.xpose.msra.mxu0 0
        %1129 = vmatpush.bf16.xpose.msra.mxu0 0
        %1130 = vmatpush.bf16.xpose.msra.mxu0 0
        %1131 = vmatpush.bf16.xpose.msra.mxu0 0
        %1132 = vmatpush.bf16.xpose.msra.mxu0 0
        %1133 = vmatpush.bf16.xpose.msra.mxu0 0
        %1134 = vmatpush.bf16.xpose.msra.mxu0 0
        %1135 = vmatpush.bf16.xpose.msra.mxu0 %v1126
        %1136 = vmatmul.bf16.gmra.mxu0 %v1123
        %v1137 = vpop.f32.mrf.mxu0
        %v1138 = vadd.f32 0.0, %v1137
        %v1139 = vpop.f32.mrf.mxu0
        %1140 = vdwg.mxu0
        %v1142 = vunpack.c.l.b16 %v1063
        %v1143 = vpack.c.b16 %v1142, %v1142
        %1144 = vrot.lane.b32.xlu0 %v1143, 96
        %v1145 = vpop.permute.xlu0 %1144
        %v1147 = vsel %vm1073, %v1063, 0
        %v1150 = vsel %vm1073, %v1145, 0
        %1152 = vmatpush.bf16.xpose.msra.mxu0 0
        %1153 = vmatpush.bf16.xpose.msra.mxu0 0
        %1154 = vmatpush.bf16.xpose.msra.mxu0 0
        %1155 = vmatpush.bf16.xpose.msra.mxu0 0
        %1156 = vmatpush.bf16.xpose.msra.mxu0 0
        %1157 = vmatpush.bf16.xpose.msra.mxu0 0
        %1158 = vmatpush.bf16.xpose.msra.mxu0 0
        %1159 = vmatpush.bf16.xpose.msra.mxu0 %v1150
        %1160 = vmatmul.bf16.gmra.mxu0 %v1147
        %v1161 = vpop.f32.mrf.mxu0
        %v1162 = vadd.f32 0.0, %v1161
        %v1163 = vpop.f32.mrf.mxu0
        %1164 = vdwg.mxu0
        %v1166 = vunpack.c.l.b16 %v1064
        %v1167 = vpack.c.b16 %v1166, %v1166
        %1168 = vrot.lane.b32.xlu0 %v1167, 96
        %v1169 = vpop.permute.xlu0 %1168
        %v1171 = vsel %vm1073, %v1064, 0
        %v1174 = vsel %vm1073, %v1169, 0
        %1176 = vmatpush.bf16.xpose.msra.mxu0 0
        %1177 = vmatpush.bf16.xpose.msra.mxu0 0
        %1178 = vmatpush.bf16.xpose.msra.mxu0 0
        %1179 = vmatpush.bf16.xpose.msra.mxu0 0
        %1180 = vmatpush.bf16.xpose.msra.mxu0 0
        %1181 = vmatpush.bf16.xpose.msra.mxu0 0
        %1182 = vmatpush.bf16.xpose.msra.mxu0 0
        %1183 = vmatpush.bf16.xpose.msra.mxu0 %v1174
        %1184 = vmatmul.bf16.gmra.mxu0 %v1171
        %v1185 = vpop.f32.mrf.mxu0
        %v1186 = vadd.f32 0.0, %v1185
        %v1187 = vpop.f32.mrf.mxu0
        %1188 = vdwg.mxu0
        %v1190 = vunpack.c.l.b16 %v1065
        %v1191 = vpack.c.b16 %v1190, %v1190
        %1192 = vrot.lane.b32.xlu0 %v1191, 96
        %v1193 = vpop.permute.xlu0 %1192
        %v1195 = vsel %vm1073, %v1065, 0
        %v1198 = vsel %vm1073, %v1193, 0
        %1200 = vmatpush.bf16.xpose.msra.mxu0 0
        %1201 = vmatpush.bf16.xpose.msra.mxu0 0
        %1202 = vmatpush.bf16.xpose.msra.mxu0 0
        %1203 = vmatpush.bf16.xpose.msra.mxu0 0
        %1204 = vmatpush.bf16.xpose.msra.mxu0 0
        %1205 = vmatpush.bf16.xpose.msra.mxu0 0
        %1206 = vmatpush.bf16.xpose.msra.mxu0 0
        %1207 = vmatpush.bf16.xpose.msra.mxu0 %v1198
        %1208 = vmatmul.bf16.gmra.mxu0 %v1195
        %v1209 = vpop.f32.mrf.mxu0
        %v1210 = vadd.f32 0.0, %v1209
        %v1211 = vpop.f32.mrf.mxu0
        %1212 = vdwg.mxu0
        %v1214 = vunpack.c.l.b16 %v1066
        %v1215 = vpack.c.b16 %v1214, %v1214
        %1216 = vrot.lane.b32.xlu0 %v1215, 96
        %v1217 = vpop.permute.xlu0 %1216
        %v1219 = vsel %vm1073, %v1066, 0
        %v1222 = vsel %vm1073, %v1217, 0
        %1224 = vmatpush.bf16.xpose.msra.mxu0 0
        %1225 = vmatpush.bf16.xpose.msra.mxu0 0
        %1226 = vmatpush.bf16.xpose.msra.mxu0 0
        %1227 = vmatpush.bf16.xpose.msra.mxu0 0
        %1228 = vmatpush.bf16.xpose.msra.mxu0 0
        %1229 = vmatpush.bf16.xpose.msra.mxu0 0
        %1230 = vmatpush.bf16.xpose.msra.mxu0 0
        %1231 = vmatpush.bf16.xpose.msra.mxu0 %v1222
        %1232 = vmatmul.bf16.gmra.mxu0 %v1219
        %v1233 = vpop.f32.mrf.mxu0
        %v1234 = vadd.f32 0.0, %v1233
        %v1235 = vpop.f32.mrf.mxu0
        %1236 = vdwg.mxu0
        %v1238 = vunpack.c.l.b16 %v1067
        %v1239 = vpack.c.b16 %v1238, %v1238
        %1240 = vrot.lane.b32.xlu0 %v1239, 96
        %v1241 = vpop.permute.xlu0 %1240
        %v1243 = vsel %vm1073, %v1067, 0
        %v1246 = vsel %vm1073, %v1241, 0
        %1248 = vmatpush.bf16.xpose.msra.mxu0 0
        %1249 = vmatpush.bf16.xpose.msra.mxu0 0
        %1250 = vmatpush.bf16.xpose.msra.mxu0 0
        %1251 = vmatpush.bf16.xpose.msra.mxu0 0
        %1252 = vmatpush.bf16.xpose.msra.mxu0 0
        %1253 = vmatpush.bf16.xpose.msra.mxu0 0
        %1254 = vmatpush.bf16.xpose.msra.mxu0 0
        %1255 = vmatpush.bf16.xpose.msra.mxu0 %v1246
        %1256 = vmatmul.bf16.gmra.mxu0 %v1243
        %v1257 = vpop.f32.mrf.mxu0
        %v1258 = vadd.f32 0.0, %v1257
        %v1259 = vpop.f32.mrf.mxu0
        %1260 = vdwg.mxu0
        %v1261 = vmul.f32 %v1090, 0.35355338
        %v1262 = vmul.f32 %v1114, 0.35355338
        %v1263 = vmul.f32 %v1138, 0.35355338
        %v1264 = vmul.f32 %v1162, 0.35355338
        %v1265 = vmul.f32 %v1186, 0.35355338
        %v1266 = vmul.f32 %v1210, 0.35355338
        %v1267 = vmul.f32 %v1234, 0.35355338
        %v1268 = vmul.f32 %v1258, 0.35355338
        %v1269 = vld [vmem:[%s1] sm:$0x1]
        %v1270 = vld [vmem:[%s1 + $0x1] sm:$0x1]
        %v1271 = vld [vmem:[%s1 + $0x2] sm:$0x1]
        %v1272 = vld [vmem:[%s1 + $0x3] sm:$0x1]
        %v1273 = vld [vmem:[%s1 + $0x4] sm:$0x1]
        %v1274 = vld [vmem:[%s1 + $0x5] sm:$0x1]
        %v1275 = vld [vmem:[%s1 + $0x6] sm:$0x1]
        %v1276 = vld [vmem:[%s1 + $0x7] sm:$0x1]
        %v1285 = vperm.slane %v1269, 0
        %v1286 = vperm.slane %v1270, 0
        %v1287 = vperm.slane %v1271, 0
        %v1288 = vperm.slane %v1272, 0
        %v1289 = vperm.slane %v1273, 0
        %v1290 = vperm.slane %v1274, 0
        %v1291 = vperm.slane %v1275, 0
        %v1292 = vperm.slane %v1276, 0
        %v1301 = vadd.f32 %v1261, %v1285
        %v1302 = vadd.f32 %v1262, %v1286
        %v1303 = vadd.f32 %v1263, %v1287
        %v1304 = vadd.f32 %v1264, %v1288
        %v1305 = vadd.f32 %v1265, %v1289
        %v1306 = vadd.f32 %v1266, %v1290
        %v1307 = vadd.f32 %v1267, %v1291
        %v1308 = vadd.f32 %v1268, %v1292
        %v1309 = vsel %vm1073, %v1301, -inf
        %1310 = vmax.xlane.f32.xlu0 %v1309
        %v1311 = vpop.xlane.xlu0 %1310
        %v1312 = vsel %vm1073, %v1302, -inf
        %1313 = vmax.xlane.f32.xlu0 %v1312
        %v1314 = vpop.xlane.xlu0 %1313
        %v1315 = vsel %vm1073, %v1303, -inf
        %1316 = vmax.xlane.f32.xlu0 %v1315
        %v1317 = vpop.xlane.xlu0 %1316
        %v1318 = vsel %vm1073, %v1304, -inf
        %1319 = vmax.xlane.f32.xlu0 %v1318
        %v1320 = vpop.xlane.xlu0 %1319
        %v1321 = vsel %vm1073, %v1305, -inf
        %1322 = vmax.xlane.f32.xlu0 %v1321
        %v1323 = vpop.xlane.xlu0 %1322
        %v1324 = vsel %vm1073, %v1306, -inf
        %1325 = vmax.xlane.f32.xlu0 %v1324
        %v1326 = vpop.xlane.xlu0 %1325
        %v1327 = vsel %vm1073, %v1307, -inf
        %1328 = vmax.xlane.f32.xlu0 %v1327
        %v1329 = vpop.xlane.xlu0 %1328
        %v1330 = vsel %vm1073, %v1308, -inf
        %1331 = vmax.xlane.f32.xlu0 %v1330
        %v1332 = vpop.xlane.xlu0 %1331
        %v1333 = vsub.f32 %v1301, %v1311
        %v1334 = vsub.f32 %v1302, %v1314
        %v1335 = vsub.f32 %v1303, %v1317
        %v1336 = vsub.f32 %v1304, %v1320
        %v1337 = vsub.f32 %v1305, %v1323
        %v1338 = vsub.f32 %v1306, %v1326
        %v1339 = vsub.f32 %v1307, %v1329
        %v1340 = vsub.f32 %v1308, %v1332
        %v1341 = vmul.f32 %v1333, 1.442695
        %v1342 = vpow.pop %v1341
        %v1343 = vmul.f32 %v1334, 1.442695
        %v1344 = vpow.pop %v1343
        %v1345 = vmul.f32 %v1335, 1.442695
        %v1346 = vpow.pop %v1345
        %v1347 = vmul.f32 %v1336, 1.442695
        %v1348 = vpow.pop %v1347
        %v1349 = vmul.f32 %v1337, 1.442695
        %v1350 = vpow.pop %v1349
        %v1351 = vmul.f32 %v1338, 1.442695
        %v1352 = vpow.pop %v1351
        %v1353 = vmul.f32 %v1339, 1.442695
        %v1354 = vpow.pop %v1353
        %v1355 = vmul.f32 %v1340, 1.442695
        %v1356 = vpow.pop %v1355
        %v1357 = vsel %vm1073, %v1342, 0.0
        %1358 = vadd.xlane.f32.xlu0 %v1357
        %v1359 = vpop.xlane.xlu0 %1358
        %v1360 = vsel %vm1073, %v1344, 0.0
        %1361 = vadd.xlane.f32.xlu0 %v1360
        %v1362 = vpop.xlane.xlu0 %1361
        %v1363 = vsel %vm1073, %v1346, 0.0
        %1364 = vadd.xlane.f32.xlu0 %v1363
        %v1365 = vpop.xlane.xlu0 %1364
        %v1366 = vsel %vm1073, %v1348, 0.0
        %1367 = vadd.xlane.f32.xlu0 %v1366
        %v1368 = vpop.xlane.xlu0 %1367
        %v1369 = vsel %vm1073, %v1350, 0.0
        %1370 = vadd.xlane.f32.xlu0 %v1369
        %v1371 = vpop.xlane.xlu0 %1370
        %v1372 = vsel %vm1073, %v1352, 0.0
        %1373 = vadd.xlane.f32.xlu0 %v1372
        %v1374 = vpop.xlane.xlu0 %1373
        %v1375 = vsel %vm1073, %v1354, 0.0
        %1376 = vadd.xlane.f32.xlu0 %v1375
        %v1377 = vpop.xlane.xlu0 %1376
        %v1378 = vsel %vm1073, %v1356, 0.0
        %1379 = vadd.xlane.f32.xlu0 %v1378
        %v1380 = vpop.xlane.xlu0 %1379
        %v1381 = vrcp.pop %v1359
        %v1382 = vrcp.pop %v1362
        %v1383 = vrcp.pop %v1365
        %v1384 = vrcp.pop %v1368
        %v1385 = vrcp.pop %v1371
        %v1386 = vrcp.pop %v1374
        %v1387 = vrcp.pop %v1377
        %v1388 = vrcp.pop %v1380
        %v1389 = vmul.f32 %v1342, %v1381
        %v1390 = vmul.f32 %v1344, %v1382
        %v1391 = vmul.f32 %v1346, %v1383
        %v1392 = vmul.f32 %v1348, %v1384
        %v1393 = vmul.f32 %v1350, %v1385
        %v1394 = vmul.f32 %v1352, %v1386
        %v1395 = vmul.f32 %v1354, %v1387
        %v1396 = vmul.f32 %v1356, %v1388
        %v1397 = vpack.c.bf16 %v1389, %v1389
        %v1398 = vpack.c.bf16 %v1390, %v1390
        %v1399 = vpack.c.bf16 %v1391, %v1391
        %v1400 = vpack.c.bf16 %v1392, %v1392
        %v1401 = vpack.c.bf16 %v1393, %v1393
        %v1402 = vpack.c.bf16 %v1394, %v1394
        %v1403 = vpack.c.bf16 %v1395, %v1395
        %v1404 = vpack.c.bf16 %v1396, %v1396
        %1405 = vrot.lane.b32.xlu0 %v1070, 64
        %v1406 = vpop.permute.xlu0 %1405
        %v1408 = vsel %vm1073, %v1397, 0
        %vm1410 = vcmask 1043456
        %v1412 = vsel %vm1410, %v1406, 0
        %1414 = vmatpush.bf16.msra.mxu0 0
        %1415 = vmatpush.bf16.msra.mxu0 0
        %1416 = vmatpush.bf16.msra.mxu0 0
        %1417 = vmatpush.bf16.msra.mxu0 0
        %1418 = vmatpush.bf16.msra.mxu0 0
        %1419 = vmatpush.bf16.msra.mxu0 0
        %1420 = vmatpush.bf16.msra.mxu0 0
        %1421 = vmatpush.bf16.msra.mxu0 %v1412
        %1422 = vmatmul.bf16.gmra.mxu0 %v1408
        %v1423 = vpop.f32.mrf.mxu0
        %v1424 = vadd.f32 0.0, %v1423
        %v1425 = vpop.f32.mrf.mxu0
        %1426 = vdwg.mxu0
        %1427 = vrot.lane.b32.xlu0 %v1095, 64
        %v1428 = vpop.permute.xlu0 %1427
        %v1430 = vsel %vm1073, %v1398, 0
        %v1433 = vsel %vm1410, %v1428, 0
        %1435 = vmatpush.bf16.msra.mxu0 0
        %1436 = vmatpush.bf16.msra.mxu0 0
        %1437 = vmatpush.bf16.msra.mxu0 0
        %1438 = vmatpush.bf16.msra.mxu0 0
        %1439 = vmatpush.bf16.msra.mxu0 0
        %1440 = vmatpush.bf16.msra.mxu0 0
        %1441 = vmatpush.bf16.msra.mxu0 0
        %1442 = vmatpush.bf16.msra.mxu0 %v1433
        %1443 = vmatmul.bf16.gmra.mxu0 %v1430
        %v1444 = vpop.f32.mrf.mxu0
        %v1445 = vadd.f32 0.0, %v1444
        %v1446 = vpop.f32.mrf.mxu0
        %1447 = vdwg.mxu0
        %1448 = vrot.lane.b32.xlu0 %v1119, 64
        %v1449 = vpop.permute.xlu0 %1448
        %v1451 = vsel %vm1073, %v1399, 0
        %v1454 = vsel %vm1410, %v1449, 0
        %1456 = vmatpush.bf16.msra.mxu0 0
        %1457 = vmatpush.bf16.msra.mxu0 0
        %1458 = vmatpush.bf16.msra.mxu0 0
        %1459 = vmatpush.bf16.msra.mxu0 0
        %1460 = vmatpush.bf16.msra.mxu0 0
        %1461 = vmatpush.bf16.msra.mxu0 0
        %1462 = vmatpush.bf16.msra.mxu0 0
        %1463 = vmatpush.bf16.msra.mxu0 %v1454
        %1464 = vmatmul.bf16.gmra.mxu0 %v1451
        %v1465 = vpop.f32.mrf.mxu0
        %v1466 = vadd.f32 0.0, %v1465
        %v1467 = vpop.f32.mrf.mxu0
        %1468 = vdwg.mxu0
        %1469 = vrot.lane.b32.xlu0 %v1143, 64
        %v1470 = vpop.permute.xlu0 %1469
        %v1472 = vsel %vm1073, %v1400, 0
        %v1475 = vsel %vm1410, %v1470, 0
        %1477 = vmatpush.bf16.msra.mxu0 0
        %1478 = vmatpush.bf16.msra.mxu0 0
        %1479 = vmatpush.bf16.msra.mxu0 0
        %1480 = vmatpush.bf16.msra.mxu0 0
        %1481 = vmatpush.bf16.msra.mxu0 0
        %1482 = vmatpush.bf16.msra.mxu0 0
        %1483 = vmatpush.bf16.msra.mxu0 0
        %1484 = vmatpush.bf16.msra.mxu0 %v1475
        %1485 = vmatmul.bf16.gmra.mxu0 %v1472
        %v1486 = vpop.f32.mrf.mxu0
        %v1487 = vadd.f32 0.0, %v1486
        %v1488 = vpop.f32.mrf.mxu0
        %1489 = vdwg.mxu0
        %1490 = vrot.lane.b32.xlu0 %v1167, 64
        %v1491 = vpop.permute.xlu0 %1490
        %v1493 = vsel %vm1073, %v1401, 0
        %v1496 = vsel %vm1410, %v1491, 0
        %1498 = vmatpush.bf16.msra.mxu0 0
        %1499 = vmatpush.bf16.msra.mxu0 0
        %1500 = vmatpush.bf16.msra.mxu0 0
        %1501 = vmatpush.bf16.msra.mxu0 0
        %1502 = vmatpush.bf16.msra.mxu0 0
        %1503 = vmatpush.bf16.msra.mxu0 0
        %1504 = vmatpush.bf16.msra.mxu0 0
        %1505 = vmatpush.bf16.msra.mxu0 %v1496
        %1506 = vmatmul.bf16.gmra.mxu0 %v1493
        %v1507 = vpop.f32.mrf.mxu0
        %v1508 = vadd.f32 0.0, %v1507
        %v1509 = vpop.f32.mrf.mxu0
        %1510 = vdwg.mxu0
        %1511 = vrot.lane.b32.xlu0 %v1191, 64
        %v1512 = vpop.permute.xlu0 %1511
        %v1514 = vsel %vm1073, %v1402, 0
        %v1517 = vsel %vm1410, %v1512, 0
        %1519 = vmatpush.bf16.msra.mxu0 0
        %1520 = vmatpush.bf16.msra.mxu0 0
        %1521 = vmatpush.bf16.msra.mxu0 0
        %1522 = vmatpush.bf16.msra.mxu0 0
        %1523 = vmatpush.bf16.msra.mxu0 0
        %1524 = vmatpush.bf16.msra.mxu0 0
        %1525 = vmatpush.bf16.msra.mxu0 0
        %1526 = vmatpush.bf16.msra.mxu0 %v1517
        %1527 = vmatmul.bf16.gmra.mxu0 %v1514
        %v1528 = vpop.f32.mrf.mxu0
        %v1529 = vadd.f32 0.0, %v1528
        %v1530 = vpop.f32.mrf.mxu0
        %1531 = vdwg.mxu0
        %1532 = vrot.lane.b32.xlu0 %v1215, 64
        %v1533 = vpop.permute.xlu0 %1532
        %v1535 = vsel %vm1073, %v1403, 0
        %v1538 = vsel %vm1410, %v1533, 0
        %1540 = vmatpush.bf16.msra.mxu0 0
        %1541 = vmatpush.bf16.msra.mxu0 0
        %1542 = vmatpush.bf16.msra.mxu0 0
        %1543 = vmatpush.bf16.msra.mxu0 0
        %1544 = vmatpush.bf16.msra.mxu0 0
        %1545 = vmatpush.bf16.msra.mxu0 0
        %1546 = vmatpush.bf16.msra.mxu0 0
        %1547 = vmatpush.bf16.msra.mxu0 %v1538
        %1548 = vmatmul.bf16.gmra.mxu0 %v1535
        %v1549 = vpop.f32.mrf.mxu0
        %v1550 = vadd.f32 0.0, %v1549
        %v1551 = vpop.f32.mrf.mxu0
        %1552 = vdwg.mxu0
        %1553 = vrot.lane.b32.xlu0 %v1239, 64
        %v1554 = vpop.permute.xlu0 %1553
        %v1556 = vsel %vm1073, %v1404, 0
        %v1559 = vsel %vm1410, %v1554, 0
        %1561 = vmatpush.bf16.msra.mxu0 0
        %1562 = vmatpush.bf16.msra.mxu0 0
        %1563 = vmatpush.bf16.msra.mxu0 0
        %1564 = vmatpush.bf16.msra.mxu0 0
        %1565 = vmatpush.bf16.msra.mxu0 0
        %1566 = vmatpush.bf16.msra.mxu0 0
        %1567 = vmatpush.bf16.msra.mxu0 0
        %1568 = vmatpush.bf16.msra.mxu0 %v1559
        %1569 = vmatmul.bf16.gmra.mxu0 %v1556
        %v1570 = vpop.f32.mrf.mxu0
        %v1571 = vadd.f32 0.0, %v1570
        %v1572 = vpop.f32.mrf.mxu0
        %1573 = vdwg.mxu0
        %1575 = vrot.lane.b32.xlu0 %v1445, 8
        %v1576 = vpop.permute.xlu0 %1575
        %1579 = vrot.lane.b32.xlu0 %v1466, 16
        %v1580 = vpop.permute.xlu0 %1579
        %1583 = vrot.lane.b32.xlu0 %v1487, 24
        %v1584 = vpop.permute.xlu0 %1583
        %v1586 = vsel %vm1073, %v1424, %v1576
        %vm1587 = vcmask 130048
        %v1588 = vsel %vm1587, %v1586, %v1580
        %vm1589 = vcmask 195584
        %v1590 = vsel %vm1589, %v1588, %v1584
        %1592 = vrot.lane.b32.xlu0 %v1529, 8
        %v1593 = vpop.permute.xlu0 %1592
        %1596 = vrot.lane.b32.xlu0 %v1550, 16
        %v1597 = vpop.permute.xlu0 %1596
        %1600 = vrot.lane.b32.xlu0 %v1571, 24
        %v1601 = vpop.permute.xlu0 %1600
        %v1603 = vsel %vm1073, %v1508, %v1593
        %v1604 = vsel %vm1587, %v1603, %v1597
        %v1605 = vsel %vm1589, %v1604, %v1601
        %v1606 = vpack.c.bf16 %v1605, %v1590
        %v1607 = vld [vmem:[%s759] sm:$0xf]
        %v1608 = vld [vmem:[%s759 + $0x4] sm:$0xf]
        %v1609 = vld [vmem:[%s759 + $0x8] sm:$0xf]
        %v1610 = vld [vmem:[%s759 + $0xc] sm:$0xf]
        %v1611 = vld [vmem:[%s917] sm:$0x1]
        %v1613 = vperm.slane %v1611, 0
        %v1619 = vunpack.c.l.b16 %v1607
        %v1620 = vunpack.c.l.b16 %v1608
        %v1621 = vunpack.c.l.b16 %v1609
        %v1622 = vunpack.c.l.b16 %v1610
        %v1623 = vpack.c.b16 %v1620, %v1619
        %v1624 = vpack.c.b16 %v1622, %v1621
        %v1628 = vsel %vm1022, %v1606, 0
        %1630 = vmatpush.bf16.msra.mxu0 0
        %1631 = vmatpush.bf16.msra.mxu0 0
        %1632 = vmatpush.bf16.msra.mxu0 0
        %1633 = vmatpush.bf16.msra.mxu0 0
        %1634 = vmatpush.bf16.msra.mxu0 0
        %1635 = vmatpush.bf16.msra.mxu0 0
        %1636 = vmatpush.bf16.msra.mxu0 %v1624
        %1637 = vmatpush.bf16.msra.mxu0 %v1623
        %1638 = vmatmul.bf16.gmra.mxu0 %v1628
        %v1639 = vpop.f32.mrf.mxu0
        %v1640 = vadd.f32 %v1613, %v1639
        %v1641 = vpop.f32.mrf.mxu0
        %v1642 = vadd.f32 %v1613, %v1641
        %1643 = vdwg.mxu0
        %v1644 = vadd.f32 %v1640, %v999
        %v1645 = vadd.f32 %v1642, %v1000
        %v1646 = vld [vmem:[%s920] sm:$0x1]
        %v1647 = vld [vmem:[%s768] sm:$0x1]
        %v1648 = vsel %vm1022, %v1644, 0.0
        %1649 = vadd.xlane.f32.xlu0 %v1648
        %v1650 = vpop.xlane.xlu0 %1649
        %v1651 = vsel %vm1022, %v1645, 0.0
        %1652 = vadd.xlane.f32.xlu0 %v1651
        %v1653 = vpop.xlane.xlu0 %1652
        %v1654 = vrcp.pop 32.0
        %v1655 = vmul.f32 32.0, %v1654
        %v1656 = vsub.f32 1.0, %v1655
        %v1657 = vmul.f32 %v1654, %v1656
        %v1658 = vadd.f32 %v1654, %v1657
        %vm1659 = vweird.f32 %v1654
        %v1660 = vsel %vm1659, %v1654, %v1658
        %v1661 = vmul.f32 %v1650, %v1660
        %v1662 = vmul.f32 %v1653, %v1660
        %v1663 = vsub.f32 %v1644, %v1661
        %v1664 = vsub.f32 %v1645, %v1662
        %v1665 = vmul.f32 %v1663, %v1663
        %v1666 = vmul.f32 %v1664, %v1664
        %v1667 = vsel %vm1022, %v1665, 0.0
        %1668 = vadd.xlane.f32.xlu0 %v1667
        %v1669 = vpop.xlane.xlu0 %1668
        %v1670 = vsel %vm1022, %v1666, 0.0
        %1671 = vadd.xlane.f32.xlu0 %v1670
        %v1672 = vpop.xlane.xlu0 %1671
        %v1673 = vmul.f32 %v1669, %v1660
        %v1674 = vmul.f32 %v1672, %v1660
        %v1675 = vadd.f32 %v1673, 1e-12
        %v1676 = vadd.f32 %v1674, 1e-12
        %v1677 = vrsqrt.pop %v1675
        %v1678 = vmul.f32 %v1677, %v1675
        %v1679 = vmul.f32 %v1678, %v1677
        %v1680 = vmul.f32 0.5, %v1679
        %v1681 = vsub.f32 1.5, %v1680
        %v1682 = vmul.f32 %v1677, %v1681
        %vm1683 = vweird.f32 %v1675
        %vm1684 = vweird.f32 %v1677
        %vm1685 = vmor %vm1683, %vm1684
        %v1686 = vsel %vm1685, %v1677, %v1682
        %v1687 = vrsqrt.pop %v1676
        %v1688 = vmul.f32 %v1687, %v1676
        %v1689 = vmul.f32 %v1688, %v1687
        %v1690 = vmul.f32 0.5, %v1689
        %v1691 = vsub.f32 1.5, %v1690
        %v1692 = vmul.f32 %v1687, %v1691
        %vm1693 = vweird.f32 %v1676
        %vm1694 = vweird.f32 %v1687
        %vm1695 = vmor %vm1693, %vm1694
        %v1696 = vsel %vm1695, %v1687, %v1692
        %v1697 = vmul.f32 %v1663, %v1686
        %v1698 = vmul.f32 %v1664, %v1696
        %v1700 = vperm.slane %v1646, 0
        %v1702 = vmul.f32 %v1697, %v1700
        %v1703 = vmul.f32 %v1698, %v1700
        %v1705 = vperm.slane %v1647, 0
        %v1707 = vadd.f32 %v1702, %v1705
        %v1708 = vadd.f32 %v1703, %v1705
        %v1709 = vpack.c.bf16 %v1708, %v1707
        %v1710 = vld [vmem:[%s778] sm:$0xf]
        %v1711 = vld [vmem:[%s778 + $0x4] sm:$0xf]
        %v1712 = vld [vmem:[%s778 + $0x8] sm:$0xf]
        %v1713 = vld [vmem:[%s778 + $0xc] sm:$0xf]
        %v1714 = vld [vmem:[%s787] sm:$0x1]
        %v1716 = vperm.slane %v1714, 0
        %v1722 = vunpack.c.l.b16 %v1710
        %v1723 = vunpack.c.l.b16 %v1711
        %v1724 = vunpack.c.l.b16 %v1712
        %v1725 = vunpack.c.l.b16 %v1713
        %v1726 = vpack.c.b16 %v1723, %v1722
        %v1727 = vpack.c.b16 %v1725, %v1724
        %v1731 = vsel %vm1022, %v1709, 0
        %1733 = vmatpush.bf16.msra.mxu0 0
        %1734 = vmatpush.bf16.msra.mxu0 0
        %1735 = vmatpush.bf16.msra.mxu0 0
        %1736 = vmatpush.bf16.msra.mxu0 0
        %1737 = vmatpush.bf16.msra.mxu0 0
        %1738 = vmatpush.bf16.msra.mxu0 0
        %1739 = vmatpush.bf16.msra.mxu0 %v1727
        %1740 = vmatpush.bf16.msra.mxu0 %v1726
        %1741 = vmatmul.bf16.gmra.mxu0 %v1731
        %v1742 = vpop.f32.mrf.mxu0
        %v1743 = vadd.f32 %v1716, %v1742
        %v1744 = vpop.f32.mrf.mxu0
        %v1745 = vadd.f32 %v1716, %v1744
        %1746 = vdwg.mxu0
        %v1747 = vmul.f32 %v1743, 0.5
        %v1748 = vmul.f32 %v1745, 0.5
        %v1749 = vmul.f32 %v1743, 0.044715
        %v1750 = vmul.f32 %v1745, 0.044715
        %v1751 = vmul.f32 %v1749, %v1743
        %v1752 = vmul.f32 %v1750, %v1745
        %v1753 = vmul.f32 %v1751, %v1743
        %v1754 = vmul.f32 %v1752, %v1745
        %v1755 = vadd.f32 %v1743, %v1753
        %v1756 = vadd.f32 %v1745, %v1754
        %v1757 = vmul.f32 %v1755, 0.7978846
        %v1758 = vmul.f32 %v1756, 0.7978846
        %v1759 = vtanh.pop %v1757
        %v1760 = vtanh.pop %v1758
        %v1761 = vadd.f32 %v1759, 1.0
        %v1762 = vadd.f32 %v1760, 1.0
        %v1763 = vmul.f32 %v1747, %v1761
        %v1764 = vmul.f32 %v1748, %v1762
        %v1765 = vpack.c.bf16 %v1764, %v1763
        %v1766 = vld [vmem:[%s925] sm:$0xf]
        %v1767 = vld [vmem:[%s925 + $0x4] sm:$0xf]
        %v1768 = vld [vmem:[%s925 + $0x8] sm:$0xf]
        %v1769 = vld [vmem:[%s925 + $0xc] sm:$0xf]
        %v1770 = vld [vmem:[%s925 + $0x10] sm:$0xf]
        %v1771 = vld [vmem:[%s925 + $0x14] sm:$0xf]
        %v1772 = vld [vmem:[%s925 + $0x18] sm:$0xf]
        %v1773 = vld [vmem:[%s925 + $0x1c] sm:$0xf]
        %v1774 = vld [vmem:[%s796] sm:$0x1]
        %v1776 = vperm.slane %v1774, 0
        %v1786 = vunpack.c.l.b16 %v1766
        %v1787 = vunpack.c.l.b16 %v1767
        %v1788 = vunpack.c.l.b16 %v1768
        %v1789 = vunpack.c.l.b16 %v1769
        %v1790 = vunpack.c.l.b16 %v1770
        %v1791 = vunpack.c.l.b16 %v1771
        %v1792 = vunpack.c.l.b16 %v1772
        %v1793 = vunpack.c.l.b16 %v1773
        %v1794 = vpack.c.b16 %v1787, %v1786
        %v1795 = vpack.c.b16 %v1789, %v1788
        %v1796 = vpack.c.b16 %v1791, %v1790
        %v1797 = vpack.c.b16 %v1793, %v1792
        %vm1802 = vcmask 523264
        %v1804 = vsel %vm1802, %v1765, 0
        %1806 = vmatpush.bf16.msra.mxu0 0
        %1807 = vmatpush.bf16.msra.mxu0 0
        %1808 = vmatpush.bf16.msra.mxu0 0
        %1809 = vmatpush.bf16.msra.mxu0 0
        %1810 = vmatpush.bf16.msra.mxu0 %v1797
        %1811 = vmatpush.bf16.msra.mxu0 %v1796
        %1812 = vmatpush.bf16.msra.mxu0 %v1795
        %1813 = vmatpush.bf16.msra.mxu0 %v1794
        %1814 = vmatmul.bf16.gmra.mxu0 %v1804
        %v1815 = vpop.f32.mrf.mxu0
        %v1816 = vadd.f32 %v1776, %v1815
        %v1817 = vpop.f32.mrf.mxu0
        %v1818 = vadd.f32 %v1776, %v1817
        %1819 = vdwg.mxu0
        %v1820 = vadd.f32 %v1816, %v1707
        %v1821 = vadd.f32 %v1818, %v1708
        %v1822 = vld [vmem:[%s805] sm:$0x1]
        %v1823 = vld [vmem:[%s814] sm:$0x1]
        %v1824 = vsel %vm1022, %v1820, 0.0
        %1825 = vadd.xlane.f32.xlu0 %v1824
        %v1826 = vpop.xlane.xlu0 %1825
        %v1827 = vsel %vm1022, %v1821, 0.0
        %1828 = vadd.xlane.f32.xlu0 %v1827
        %v1829 = vpop.xlane.xlu0 %1828
        %v1830 = vmul.f32 %v1826, %v1660
        %v1831 = vmul.f32 %v1829, %v1660
        %v1832 = vsub.f32 %v1820, %v1830
        %v1833 = vsub.f32 %v1821, %v1831
        %v1834 = vmul.f32 %v1832, %v1832
        %v1835 = vmul.f32 %v1833, %v1833
        %v1836 = vsel %vm1022, %v1834, 0.0
        %1837 = vadd.xlane.f32.xlu0 %v1836
        %v1838 = vpop.xlane.xlu0 %1837
        %v1839 = vsel %vm1022, %v1835, 0.0
        %1840 = vadd.xlane.f32.xlu0 %v1839
        %v1841 = vpop.xlane.xlu0 %1840
        %v1842 = vmul.f32 %v1838, %v1660
        %v1843 = vmul.f32 %v1841, %v1660
        %v1844 = vadd.f32 %v1842, 1e-12
        %v1845 = vadd.f32 %v1843, 1e-12
        %v1846 = vrsqrt.pop %v1844
        %v1847 = vmul.f32 %v1846, %v1844
        %v1848 = vmul.f32 %v1847, %v1846
        %v1849 = vmul.f32 0.5, %v1848
        %v1850 = vsub.f32 1.5, %v1849
        %v1851 = vmul.f32 %v1846, %v1850
        %vm1852 = vweird.f32 %v1844
        %vm1853 = vweird.f32 %v1846
        %vm1854 = vmor %vm1852, %vm1853
        %v1855 = vsel %vm1854, %v1846, %v1851
        %v1856 = vrsqrt.pop %v1845
        %v1857 = vmul.f32 %v1856, %v1845
        %v1858 = vmul.f32 %v1857, %v1856
        %v1859 = vmul.f32 0.5, %v1858
        %v1860 = vsub.f32 1.5, %v1859
        %v1861 = vmul.f32 %v1856, %v1860
        %vm1862 = vweird.f32 %v1845
        %vm1863 = vweird.f32 %v1856
        %vm1864 = vmor %vm1862, %vm1863
        %v1865 = vsel %vm1864, %v1856, %v1861
        %v1866 = vmul.f32 %v1832, %v1855
        %v1867 = vmul.f32 %v1833, %v1865
        %v1869 = vperm.slane %v1822, 0
        %v1871 = vmul.f32 %v1866, %v1869
        %v1872 = vmul.f32 %v1867, %v1869
        %v1874 = vperm.slane %v1823, 0
        %v1876 = vadd.f32 %v1871, %v1874
        %v1877 = vadd.f32 %v1872, %v1874
        %1878 = vst.msk [vmem:[#allocation2] sm:$0xff] %vm1022, %v1876
        %1879 = vst.msk [vmem:[#allocation2 + $0x8] sm:$0xff] %vm1022, %v1877
        %p1880 = scmp.eq.s32.totalorder %s31, 1
        // Predicated region
        $region141: #{tpu_custom_call.1} parent=91 // pred_check
          %p1881 = pneg %p1880
        $region142: #{tpu_custom_call.1} parent=91 // pred_check_branch
          %1883 = sbr.rel (%p1881) target = $region144
        $region143: #{tpu_custom_call.1} parent=91 // pred_region
          %v1884 = vpack.c.bf16 %v1877, %v1876
          %v1885 = vld [vmem:[%s16] sm:$0xff]
          %v1886 = vld [vmem:[%s16 + $0x8] sm:$0xff]
          %v1887 = vld [vmem:[%s16 + $0x10] sm:$0xff]
          %v1888 = vld [vmem:[%s16 + $0x18] sm:$0xff]
          %v1889 = vld [vmem:[%s16 + $0x20] sm:$0xff]
          %v1890 = vld [vmem:[%s16 + $0x28] sm:$0xff]
          %v1891 = vld [vmem:[%s16 + $0x30] sm:$0xff]
          %v1892 = vld [vmem:[%s16 + $0x38] sm:$0xff]
          %v1893 = vld [vmem:[%s16 + $0x40] sm:$0xff]
          %v1894 = vld [vmem:[%s16 + $0x48] sm:$0xff]
          %v1895 = vld [vmem:[%s16 + $0x50] sm:$0xff]
          %v1896 = vld [vmem:[%s16 + $0x58] sm:$0xff]
          %v1909 = vunpack.c.l.b16 %v1885
          %v1910 = vunpack.c.h.b16 %v1885
          %v1911 = vunpack.c.l.b16 %v1886
          %v1912 = vunpack.c.h.b16 %v1886
          %v1913 = vunpack.c.l.b16 %v1887
          %v1914 = vunpack.c.h.b16 %v1887
          %v1915 = vunpack.c.l.b16 %v1888
          %v1916 = vunpack.c.h.b16 %v1888
          %v1917 = vunpack.c.l.b16 %v1889
          %v1918 = vunpack.c.h.b16 %v1889
          %v1919 = vunpack.c.l.b16 %v1890
          %v1920 = vunpack.c.h.b16 %v1890
          %v1921 = vunpack.c.l.b16 %v1891
          %v1922 = vunpack.c.h.b16 %v1891
          %v1923 = vunpack.c.l.b16 %v1892
          %v1924 = vunpack.c.h.b16 %v1892
          %v1925 = vunpack.c.l.b16 %v1893
          %v1926 = vunpack.c.h.b16 %v1893
          %v1927 = vunpack.c.l.b16 %v1894
          %v1928 = vunpack.c.h.b16 %v1894
          %v1929 = vunpack.c.l.b16 %v1895
          %v1930 = vunpack.c.h.b16 %v1895
          %v1931 = vunpack.c.l.b16 %v1896
          %v1932 = vunpack.c.h.b16 %v1896
          %v1933 = vpack.c.b16 %v1915, %v1909
          %v1934 = vpack.c.b16 %v1916, %v1910
          %v1935 = vpack.c.b16 %v1917, %v1911
          %v1936 = vpack.c.b16 %v1918, %v1912
          %v1937 = vpack.c.b16 %v1919, %v1913
          %v1938 = vpack.c.b16 %v1920, %v1914
          %v1939 = vpack.c.b16 %v1927, %v1921
          %v1940 = vpack.c.b16 %v1928, %v1922
          %v1941 = vpack.c.b16 %v1929, %v1923
          %v1942 = vpack.c.b16 %v1930, %v1924
          %v1943 = vpack.c.b16 %v1931, %v1925
          %v1944 = vpack.c.b16 %v1932, %v1926
          %v1958 = vsel %vm1022, %v1884, 0
          %1960 = vmatpush.bf16.msra.mxu0 0
          %1961 = vmatpush.bf16.msra.mxu0 0
          %1962 = vmatpush.bf16.msra.mxu0 0
          %1963 = vmatpush.bf16.msra.mxu0 0
          %1964 = vmatpush.bf16.msra.mxu0 0
          %1965 = vmatpush.bf16.msra.mxu0 0
          %1966 = vmatpush.bf16.msra.mxu0 %v1939
          %1967 = vmatpush.bf16.msra.mxu0 %v1933
          %1968 = vmatmul.bf16.gmra.mxu0 %v1958
          %v1969 = vpop.f32.mrf.mxu0
          %v1970 = vadd.f32 0.0, %v1969
          %v1971 = vpop.f32.mrf.mxu0
          %v1972 = vadd.f32 0.0, %v1971
          %1973 = vdwg.mxu0
          %1974 = vmatpush.bf16.msra.mxu0 0
          %1975 = vmatpush.bf16.msra.mxu0 0
          %1976 = vmatpush.bf16.msra.mxu0 0
          %1977 = vmatpush.bf16.msra.mxu0 0
          %1978 = vmatpush.bf16.msra.mxu0 0
          %1979 = vmatpush.bf16.msra.mxu0 0
          %1980 = vmatpush.bf16.msra.mxu0 %v1940
          %1981 = vmatpush.bf16.msra.mxu0 %v1934
          %1982 = vmatmul.bf16.gmra.mxu0 %v1958
          %v1983 = vpop.f32.mrf.mxu0
          %v1984 = vadd.f32 0.0, %v1983
          %v1985 = vpop.f32.mrf.mxu0
          %v1986 = vadd.f32 0.0, %v1985
          %1987 = vdwg.mxu0
          %1988 = vmatpush.bf16.msra.mxu0 0
          %1989 = vmatpush.bf16.msra.mxu0 0
          %1990 = vmatpush.bf16.msra.mxu0 0
          %1991 = vmatpush.bf16.msra.mxu0 0
          %1992 = vmatpush.bf16.msra.mxu0 0
          %1993 = vmatpush.bf16.msra.mxu0 0
          %1994 = vmatpush.bf16.msra.mxu0 %v1941
          %1995 = vmatpush.bf16.msra.mxu0 %v1935
          %1996 = vmatmul.bf16.gmra.mxu0 %v1958
          %v1997 = vpop.f32.mrf.mxu0
          %v1998 = vadd.f32 0.0, %v1997
          %v1999 = vpop.f32.mrf.mxu0
          %v2000 = vadd.f32 0.0, %v1999
          %2001 = vdwg.mxu0
          %2002 = vmatpush.bf16.msra.mxu0 0
          %2003 = vmatpush.bf16.msra.mxu0 0
          %2004 = vmatpush.bf16.msra.mxu0 0
          %2005 = vmatpush.bf16.msra.mxu0 0
          %2006 = vmatpush.bf16.msra.mxu0 0
          %2007 = vmatpush.bf16.msra.mxu0 0
          %2008 = vmatpush.bf16.msra.mxu0 %v1942
          %2009 = vmatpush.bf16.msra.mxu0 %v1936
          %2010 = vmatmul.bf16.gmra.mxu0 %v1958
          %v2011 = vpop.f32.mrf.mxu0
          %v2012 = vadd.f32 0.0, %v2011
          %v2013 = vpop.f32.mrf.mxu0
          %v2014 = vadd.f32 0.0, %v2013
          %2015 = vdwg.mxu0
          %2016 = vmatpush.bf16.msra.mxu0 0
          %2017 = vmatpush.bf16.msra.mxu0 0
          %2018 = vmatpush.bf16.msra.mxu0 0
          %2019 = vmatpush.bf16.msra.mxu0 0
          %2020 = vmatpush.bf16.msra.mxu0 0
          %2021 = vmatpush.bf16.msra.mxu0 0
          %2022 = vmatpush.bf16.msra.mxu0 %v1943
          %2023 = vmatpush.bf16.msra.mxu0 %v1937
          %2024 = vmatmul.bf16.gmra.mxu0 %v1958
          %v2025 = vpop.f32.mrf.mxu0
          %v2026 = vadd.f32 0.0, %v2025
          %v2027 = vpop.f32.mrf.mxu0
          %v2028 = vadd.f32 0.0, %v2027
          %2029 = vdwg.mxu0
          %2030 = vmatpush.bf16.msra.mxu0 0
          %2031 = vmatpush.bf16.msra.mxu0 0
          %2032 = vmatpush.bf16.msra.mxu0 0
          %2033 = vmatpush.bf16.msra.mxu0 0
          %2034 = vmatpush.bf16.msra.mxu0 0
          %2035 = vmatpush.bf16.msra.mxu0 0
          %2036 = vmatpush.bf16.msra.mxu0 %v1944
          %2037 = vmatpush.bf16.msra.mxu0 %v1938
          %2038 = vmatmul.bf16.gmra.mxu0 %v1958
          %v2039 = vpop.f32.mrf.mxu0
          %v2040 = vadd.f32 0.0, %v2039
          %v2041 = vpop.f32.mrf.mxu0
          %v2042 = vadd.f32 0.0, %v2041
          %2043 = vdwg.mxu0
          %v2045 = vrot.slane %v1970, 2
          %vm2047 = vcmask 1044480
          %v2048 = vsel %vm2047, %v2045, 0.0
          %v2050 = vrot.slane %v1984, 1
          %vm2052 = vcmask 1040384
          %v2053 = vsel %vm2052, 0.0, %v2050
          %vm2054 = vcmask 1045504
          %v2055 = vsel %vm2054, %v2053, 0.0
          %v2056 = vadd.f32 %v2048, %v2055
          %vm2057 = vcmask 1041408
          %v2058 = vsel %vm2057, 0.0, %v1998
          %vm2059 = vcmask 1046528
          %v2060 = vsel %vm2059, %v2058, 0.0
          %v2061 = vadd.f32 %v2056, %v2060
          %v2063 = vrot.slane %v2012, 7
          %vm2065 = vcmask 1042432
          %v2066 = vsel %vm2065, 0.0, %v2063
          %v2067 = vadd.f32 %v2061, %v2066
          %v2069 = vrot.slane %v2026, 6
          %v2071 = vsel %vm1410, 0.0, %v2069
          %v2072 = vsel %vm2052, %v2069, 0.0
          %v2073 = vadd.f32 %v2067, %v2071
          %v2074 = vadd.f32 %v2072, 0.0
          %v2076 = vrot.slane %v2040, 5
          %v2078 = vsel %vm2047, 0.0, %v2076
          %v2079 = vadd.f32 %v2073, %v2078
          %v2080 = vadd.f32 %v2074, %v2076
          %v2081 = vld [vmem:[#allocation15] sm:$0x1]
          %v2083 = vperm.slane %v2081, 0
          %v2085 = vadd.f32 %v2079, %v2083
          %v2086 = vadd.f32 %v2080, %v2083
          %vm2087 = vcmask 31744
          %2088 = vst.msk [vmem:[%s18] sm:$0xff] %vm2087, %v2085
          %vm2089 = vcmask 25600
          %2090 = vst.msk [vmem:[%s18 + $0x8] sm:$0x3] %vm2089, %v2086
          %v2092 = vrot.slane %v1972, 2
          %v2094 = vsel %vm2047, %v2092, 0.0
          %v2096 = vrot.slane %v1986, 1
          %v2098 = vsel %vm2052, 0.0, %v2096
          %v2099 = vsel %vm2054, %v2098, 0.0
          %v2100 = vadd.f32 %v2094, %v2099
          %v2101 = vsel %vm2057, 0.0, %v2000
          %v2102 = vsel %vm2059, %v2101, 0.0
          %v2103 = vadd.f32 %v2100, %v2102
          %v2105 = vrot.slane %v2014, 7
          %v2107 = vsel %vm2065, 0.0, %v2105
          %v2108 = vadd.f32 %v2103, %v2107
          %v2110 = vrot.slane %v2028, 6
          %v2112 = vsel %vm1410, 0.0, %v2110
          %v2113 = vsel %vm2052, %v2110, 0.0
          %v2114 = vadd.f32 %v2108, %v2112
          %v2115 = vadd.f32 %v2113, 0.0
          %v2117 = vrot.slane %v2042, 5
          %v2119 = vsel %vm2047, 0.0, %v2117
          %v2120 = vadd.f32 %v2114, %v2119
          %v2121 = vadd.f32 %v2115, %v2117
          %v2122 = vld [vmem:[#allocation15] sm:$0x1]
          %v2124 = vperm.slane %v2122, 0
          %v2126 = vadd.f32 %v2120, %v2124
          %v2127 = vadd.f32 %v2121, %v2124
          %s2128 = scalar_lea.vmem %s18, 16
          %2129 = vst.msk [vmem:[%s2128] sm:$0xff] %vm2087, %v2126
          %2130 = vst.msk [vmem:[%s2128 + $0x8] sm:$0x3] %vm2089, %v2127
        $region144: #{tpu_custom_call.1} parent=91 // pred_fallthru
          _
        // Predicated region
        $region145: #{tpu_custom_call.1} parent=91 // pred_check
          %p2131 = pneg %p482
        $region146: #{tpu_custom_call.1} parent=91 // pred_check_branch
          %2133 = sbr.rel (%p2131) target = $region148
        $region147: #{tpu_custom_call.1} parent=91 // pred_region
          _
        $region148: #{tpu_custom_call.1} parent=91 // pred_fallthru
          _
        // Predicated region
        $region149: #{tpu_custom_call.1} parent=91 // pred_check
          %p2134 = pneg %p482
        $region150: #{tpu_custom_call.1} parent=91 // pred_check_branch
          %2136 = sbr.rel (%p2134) target = $region152
        $region151: #{tpu_custom_call.1} parent=91 // pred_region
          _
        $region152: #{tpu_custom_call.1} parent=91 // pred_fallthru
          _
      $region92: #{tpu_custom_call.1} parent=5 // pred_fallthru
        _
      %p2137 = scmp.le.s32.totalorder 2, %s26
      // Predicated region
      $region153: #{tpu_custom_call.1} parent=5 // pred_check
        %p2138 = pneg %p2137
      $region154: #{tpu_custom_call.1} parent=5 // pred_check_branch
        %2140 = sbr.rel (%p2138) target = $region156
      $region155: #{tpu_custom_call.1} parent=5 // pred_region
        %s2141 = ssub.s32 %s26, 2
      $region156: #{tpu_custom_call.1} parent=5 // pred_fallthru
        _
    $region6: #{tpu_custom_call.1} parent=1 // loop_footer
      %s30 = sadd.s32 1, %s26
    $region7: #{tpu_custom_call.1} parent=1 // loop_footer_branch
      %25 = sbr.rel target = $region3
    $region8: #{tpu_custom_call.1} parent=1 // loop_exit
      _
    %2142 = vsyncpa [#allocation4], 1
    %s2143 = scalar_lea.sflag [#allocation4], 1
    %2144 = vsyncpa %s2143, 1
    %2145 = vsyncpa [#allocation6], 1

</llo_original>
